<compile_context>
chip_gen: v5e
topology: v5e:2x2
jax: 0.10.0
libtpu: 0.0.40
codegen_flags: <defaults>
</compile_context>

<pallas_src>
import numpy as np
import jax
import jax.numpy as jnp
from jax import lax
from jax.experimental import pallas as pl
from jax.experimental.pallas import tpu as pltpu

GROUPS = 4  # BasicConv in the ViG gcn_lib uses Conv2d(..., 1, bias=bias, groups=4)


def _make_gin_kernel(tn, nb, n_chunks, count_dt):
    """Build the kernel with static tile sizes closed over."""

    def kernel(eps_ref, x_ref, idx_ref, w_ref, b_ref, o_ref, agg_ref):
        # eps_ref: (1, 1)        f32  SMEM
        # x_ref:   (Cin, Npad)   f32  VMEM  all node features of this batch element
        # idx_ref: (K, TN)       i32  VMEM  neighbor ids, nodes on lanes
        # w_ref:   (Cout, Cin)   f32  VMEM  block-diagonal grouped 1x1-conv weight
        # b_ref:   (Cout, 1)     f32  VMEM
        # o_ref:   (Cout, TN)    f32  VMEM
        # agg_ref: (Cin, TN)     f32  VMEM scratch (neighbor-sum accumulator)
        idx = idx_ref[...]                                        # (K, TN)
        k = idx.shape[0]
        # Hoisted out of the chunk loop (JAX does not CSE broadcast_in_dim).
        row_base = lax.broadcasted_iota(jnp.int32, (nb, tn), 0)   # (NB, TN)

        agg_ref[...] = jnp.zeros_like(agg_ref)

        def chunk(c, carry):
            base = pl.multiple_of(c * nb, nb)
            # Shift the small (K, TN) idx tile instead of offsetting the
            # (NB, TN) iota: saves one NB*TN-sized add per chunk.
            idx_s = idx - base                                    # (K, TN)
            # A_chunk[m, t] = #{j : idx[j, t] == base + m}  so that
            #   agg[:, t] += sum_{m in chunk} x[:, base+m] * A_chunk[m, t]
            # Counts are exact in count_dt (bf16 holds integers up to 256).
            # NOTE: out-of-range ids contribute 0 (PyTorch gather would error).
            a = (idx_s[0:1, :] == row_base).astype(count_dt)
            for j in range(1, k):                                 # K small & static -> unrolled
                a = a + (idx_s[j:j + 1, :] == row_base).astype(count_dt)
            x_chunk = x_ref[:, pl.ds(base, nb)]                   # (Cin, NB) f32
            agg_ref[...] += jnp.dot(x_chunk, a.astype(jnp.float32),
                                    preferred_element_type=jnp.float32)
            return carry

        lax.fori_loop(0, n_chunks, chunk, 0, unroll=(n_chunks <= 8))

        # Self term: slice the current node tile out of the resident x block
        # (no separate double-buffered x-tile input stream).
        start = pl.multiple_of(pl.program_id(1) * tn, tn)
        x_self = x_ref[:, pl.ds(start, tn)]                       # (Cin, TN)

        eps = eps_ref[0, 0]
        h = (1.0 + eps) * x_self + agg_ref[...]                   # (Cin, TN) f32

        # Grouped 1x1 conv (block-diagonal weight) + bias + ReLU, lane-dense store.
        # TODO(synk): at large channel stages (Cin/4, Cout/4 >= 128) split this into
        # 4 per-group matmuls to avoid the 4x block-diagonal MXU FLOP tax.
        out = jnp.dot(w_ref[...], h, preferred_element_type=jnp.float32) + b_ref[...]
        o_ref[...] = jnp.maximum(out, 0.0).astype(o_ref.dtype)

    return kernel


def _count_dtype():
    """bf16 count accumulation where the VALU is bf16-native (v6e/v7x); f32 elsewhere."""
    try:
        kind = jax.devices()[0].device_kind.lower()
    except Exception:
        return jnp.float32
    if ("v6" in kind) or ("v7" in kind) or ("7x" in kind):
        return jnp.bfloat16
    return jnp.float32   # v5e and older: no native bf16 VALU


def _vmem_footprint(cin, cout, k, n_pad, tn, nb, count_bytes):
    f32 = 4
    fp = 2 * cin * n_pad * f32            # x block (double-buffered by the pipeline)
    fp += 2 * k * tn * 4                  # idx tile
    fp += 2 * cout * tn * f32             # out tile
    fp += 2 * (cout * cin + cout) * f32   # weight + bias
    fp += cin * tn * f32                  # agg scratch
    # per-chunk temporaries: iota + count matrix (+ its f32 copy) + mask slack
    fp += nb * tn * (4 + count_bytes + f32) + nb * tn * count_bytes
    return fp


def _choose_tiles(n_pad, cin, cout, k, count_bytes, budget=24 << 20):
    """Pick (TN, NB) so the per-step VMEM footprint stays under `budget`
    (conservative vs. the 16/32/32 MiB default scoped VMEM on v5e/v6e/v7x)."""
    for tn in (512, 256, 128):
        if n_pad % tn:
            continue
        for nb in (512, 256, 128):
            if n_pad % nb:
                continue
            fp = _vmem_footprint(cin, cout, k, n_pad, tn, nb, count_bytes)
            if fp <= budget:
                return tn, nb, fp
    tn = nb = 128
    return tn, nb, _vmem_footprint(cin, cout, k, n_pad, tn, nb, count_bytes)


def gin_conv2d(x_nchw, edge_index, eps, w_bd, bias):
    """x_nchw: (B, Cin, N, 1) f32, edge_index: (2, B, N, K) int -> (B, Cout, N, 1)."""
    B, Cin, N, _ = x_nchw.shape
    K = edge_index.shape[-1]
    Cout = w_bd.shape[0]

    count_dt = _count_dtype()
    if count_dt == jnp.bfloat16:
        assert K <= 255, "bf16 count accumulation is exact only for K <= 255"

    # Channels on sublanes, nodes on lanes (native NCHW slab, lane-dense in N).
    x_bcn = x_nchw[..., 0].astype(jnp.float32)                          # (B, Cin, N)
    idx = jnp.transpose(edge_index[0].astype(jnp.int32), (0, 2, 1))     # (B, K, N)

    # Pad N to a multiple of 128: unmasked lane-dense stores + node tiling.
    # Padded columns (zero features, idx 0) are never referenced by real nodes
    # (neighbor ids < N) and are sliced off below.
    N_pad = ((N + 127) // 128) * 128
    if N_pad != N:
        x_bcn = jnp.pad(x_bcn, ((0, 0), (0, 0), (0, N_pad - N)))
        idx = jnp.pad(idx, ((0, 0), (0, 0), (0, N_pad - N)))

    eps_smem = jnp.reshape(eps, (1, 1)).astype(jnp.float32)
    bias2d = jnp.reshape(bias, (Cout, 1)).astype(jnp.float32)
    w_f32 = w_bd.astype(jnp.float32)

    count_bytes = 2 if count_dt == jnp.bfloat16 else 4
    TN, NB, fp = _choose_tiles(N_pad, Cin, Cout, K, count_bytes)
    n_chunks = N_pad // NB
    grid = (B, N_pad // TN)
    vmem_limit = int(min(48 << 20, max(32 << 20, 2 * fp)))

    kernel = _make_gin_kernel(TN, NB, n_chunks, count_dt)

    out_bcn = pl.pallas_call(
        kernel,
        out_shape=jax.ShapeDtypeStruct((B, Cout, N_pad), jnp.float32),
        grid=grid,
        in_specs=[
            pl.BlockSpec(memory_space=pltpu.MemorySpace.SMEM),          # eps scalar
            # Full x slab for this batch element (gather source + self term).
            # Block index depends only on b (outermost axis) -> re-fetched B times total.
            pl.BlockSpec((None, Cin, N_pad), lambda b, t: (b, 0, 0)),
            pl.BlockSpec((None, K, TN), lambda b, t: (b, 0, t)),        # neighbor ids, lane-dense in N
            pl.BlockSpec((Cout, Cin), lambda b, t: (0, 0)),             # weight (shared)
            pl.BlockSpec((Cout, 1), lambda b, t: (0, 0)),               # bias   (shared)
        ],
        out_specs=pl.BlockSpec((None, Cout, TN), lambda b, t: (b, 0, t)),
        scratch_shapes=[pltpu.VMEM((Cin, TN), jnp.float32)],            # agg accumulator
        compiler_params=pltpu.CompilerParams(
            dimension_semantics=("parallel", "parallel"),
            vmem_limit_bytes=vmem_limit),
    )(eps_smem, x_bcn, idx, w_f32, bias2d)

    return out_bcn[:, :, :N][..., None]                                 # (B, Cout, N, 1)


def init_params(key, cin, cout, groups=GROUPS):
    """Deterministic init mimicking nn.Conv2d(cin, cout, 1, groups=4, bias=True)."""
    cig, cog = cin // groups, cout // groups
    kw, kb = jax.random.split(key)
    bound = 1.0 / (cig ** 0.5)          # kaiming-uniform style bound, 1x1 kernel
    w = jax.random.uniform(kw, (cout, cig), jnp.float32, -bound, bound)  # (Cout, Cin/g)
    b = jax.random.uniform(kb, (cout,), jnp.float32, -bound, bound)
    # expand grouped weight into a block-diagonal (Cout, Cin) matrix (W @ h layout)
    w_bd = jnp.zeros((cout, cin), jnp.float32)
    for g in range(groups):
        w_bd = w_bd.at[g * cog:(g + 1) * cog, g * cig:(g + 1) * cig].set(
            w[g * cog:(g + 1) * cog, :])
    eps = jnp.zeros((1,), jnp.float32)  # eps_init = 0.0 as in the module
    return eps, w_bd, b


def reference(x_nchw, edge_index, eps, w_bd, bias):
    """Pure-JAX reference of the PyTorch forward for verification."""
    x_bcn = x_nchw[..., 0]                                         # (B, Cin, N)
    idx = edge_index[0]                                            # (B, N, K)
    x_j = jax.vmap(lambda xb, ib: xb[:, ib])(x_bcn, idx)           # (B, Cin, N, K)
    agg = x_j.sum(axis=-1)                                         # (B, Cin, N)
    h = (1.0 + eps[0]) * x_bcn + agg
    out = jnp.einsum('oc,bcn->bon', w_bd, h) + bias[None, :, None] # (B, Cout, N)
    return jnp.maximum(out, 0.0)[..., None]                        # (B, Cout, N, 1)


if __name__ == "__main__":
    # N=320 exercises padding (-> 384), node tiling (TN=128, grid=(B, 3)) and
    # the blocked count-matrix build (NB=128, 3 chunks).
    B, Cin, Cout, N, K = 2, 16, 32, 320, 8
    key = jax.random.PRNGKey(0)
    k_x, k_e, k_p = jax.random.split(key, 3)

    x = jax.random.normal(k_x, (B, Cin, N, 1), jnp.float32)          # NCHW, W == 1
    edge_index = jax.random.randint(k_e, (2, B, N, K), 0, N, jnp.int32)
    eps, w_bd, bias = init_params(k_p, Cin, Cout)
    eps = jnp.array([0.1], jnp.float32)  # non-zero to exercise the eps path (module init is 0.0)

    out = gin_conv2d(x, edge_index, eps, w_bd, bias)
    out = jax.block_until_ready(out)

    ref = reference(x, edge_index, eps, w_bd, bias)
    assert out.shape == (B, Cout, N, 1)
    np.testing.assert_allclose(np.asarray(out), np.asarray(ref), rtol=1e-5, atol=1e-5)
    print("KERNEL_OK")
</pallas_src>

<mosaic_0001>
module attributes {stable_mosaic.version = 11 : i64} {
  func.func @kernel(%arg0: i32, %arg1: i32, %arg2: memref<1x1xf32, #tpu.memory_space<smem>>, %arg3: memref<1x16x384xf32, #tpu.memory_space<vmem>>, %arg4: memref<1x8x128xi32, #tpu.memory_space<vmem>>, %arg5: memref<32x16xf32, #tpu.memory_space<vmem>>, %arg6: memref<32x1xf32, #tpu.memory_space<vmem>>, %arg7: memref<1x32x128xf32, #tpu.memory_space<vmem>>, %arg8: memref<16x128xf32, #tpu.memory_space<vmem>>) attributes {dimension_semantics = [#tpu.dimension_semantics<parallel>, #tpu.dimension_semantics<parallel>], iteration_bounds = array<i64: 2, 3>, scalar_prefetch = 0 : i64, scratch_operands = 1 : i64, tpu.core_type = #tpu.core_type<tc>, window_params = [{transform_indices = @transform_0, window_bounds = array<i64: 1, 1>}, {transform_indices = @transform_1, window_bounds = array<i64: 1, 16, 384>}, {transform_indices = @transform_2, window_bounds = array<i64: 1, 8, 128>}, {pipeline_mode = #tpu.pipeline_mode<synchronous>, transform_indices = @transform_3, window_bounds = array<i64: 32, 16>}, {pipeline_mode = #tpu.pipeline_mode<synchronous>, transform_indices = @transform_4, window_bounds = array<i64: 32, 1>}, {transform_indices = @transform_5, window_bounds = array<i64: 1, 32, 128>}]} {
    %c0 = arith.constant 0 : index
    %c0_0 = arith.constant 0 : index
    %c0_1 = arith.constant 0 : index
    %0 = vector.load %arg4[%c0, %c0_0, %c0_1] : memref<1x8x128xi32, #tpu.memory_space<vmem>>, vector<1x8x128xi32>
    %1 = vector.shape_cast %0 : vector<1x8x128xi32> to vector<8x128xi32>
    %2 = tpu.iota {dimensions = array<i32: 0>} : vector<128x128xi32>
    %cst = arith.constant 0.000000e+00 : f32
    %3 = vector.broadcast %cst : f32 to vector<16x128xf32>
    %c0_2 = arith.constant 0 : index
    %c0_3 = arith.constant 0 : index
    %4 = vector.load %arg8[%c0_2, %c0_3] : memref<16x128xf32, #tpu.memory_space<vmem>>, vector<16x128xf32>
    tpu.vector_store %arg8[%c0_2, %c0_3], %3 {strides = array<i32>} : memref<16x128xf32, #tpu.memory_space<vmem>>, vector<16x128xf32>,
    %c0_i32 = arith.constant 0 : i32
    %c128_i32 = arith.constant 128 : i32
    %5 = arith.muli %c0_i32, %c128_i32 : i32
    %6 = tpu.assume_multiple %5, 128 : i32
    %7 = vector.broadcast %6 : i32 to vector<8x128xi32>
    %8 = arith.subi %1, %7 : vector<8x128xi32>
    %9 = vector.extract_strided_slice %8 {offsets = [0, 0], sizes = [1, 128], strides = [1, 1]} : vector<8x128xi32> to vector<1x128xi32>
    %10 = vector.broadcast %9 : vector<1x128xi32> to vector<128x128xi32>
    %11 = arith.cmpi eq, %10, %2 : vector<128x128xi32>
    %12 = arith.extui %11 : vector<128x128xi1> to vector<128x128xi32>
    %13 = arith.sitofp %12 : vector<128x128xi32> to vector<128x128xf32>
    %14 = vector.extract_strided_slice %8 {offsets = [1, 0], sizes = [1, 128], strides = [1, 1]} : vector<8x128xi32> to vector<1x128xi32>
    %15 = vector.broadcast %14 : vector<1x128xi32> to vector<128x128xi32>
    %16 = arith.cmpi eq, %15, %2 : vector<128x128xi32>
    %17 = arith.extui %16 : vector<128x128xi1> to vector<128x128xi32>
    %18 = arith.sitofp %17 : vector<128x128xi32> to vector<128x128xf32>
    %19 = arith.addf %13, %18 : vector<128x128xf32>
    %20 = vector.extract_strided_slice %8 {offsets = [2, 0], sizes = [1, 128], strides = [1, 1]} : vector<8x128xi32> to vector<1x128xi32>
    %21 = vector.broadcast %20 : vector<1x128xi32> to vector<128x128xi32>
    %22 = arith.cmpi eq, %21, %2 : vector<128x128xi32>
    %23 = arith.extui %22 : vector<128x128xi1> to vector<128x128xi32>
    %24 = arith.sitofp %23 : vector<128x128xi32> to vector<128x128xf32>
    %25 = arith.addf %19, %24 : vector<128x128xf32>
    %26 = vector.extract_strided_slice %8 {offsets = [3, 0], sizes = [1, 128], strides = [1, 1]} : vector<8x128xi32> to vector<1x128xi32>
    %27 = vector.broadcast %26 : vector<1x128xi32> to vector<128x128xi32>
    %28 = arith.cmpi eq, %27, %2 : vector<128x128xi32>
    %29 = arith.extui %28 : vector<128x128xi1> to vector<128x128xi32>
    %30 = arith.sitofp %29 : vector<128x128xi32> to vector<128x128xf32>
    %31 = arith.addf %25, %30 : vector<128x128xf32>
    %32 = vector.extract_strided_slice %8 {offsets = [4, 0], sizes = [1, 128], strides = [1, 1]} : vector<8x128xi32> to vector<1x128xi32>
    %33 = vector.broadcast %32 : vector<1x128xi32> to vector<128x128xi32>
    %34 = arith.cmpi eq, %33, %2 : vector<128x128xi32>
    %35 = arith.extui %34 : vector<128x128xi1> to vector<128x128xi32>
    %36 = arith.sitofp %35 : vector<128x128xi32> to vector<128x128xf32>
    %37 = arith.addf %31, %36 : vector<128x128xf32>
    %38 = vector.extract_strided_slice %8 {offsets = [5, 0], sizes = [1, 128], strides = [1, 1]} : vector<8x128xi32> to vector<1x128xi32>
    %39 = vector.broadcast %38 : vector<1x128xi32> to vector<128x128xi32>
    %40 = arith.cmpi eq, %39, %2 : vector<128x128xi32>
    %41 = arith.extui %40 : vector<128x128xi1> to vector<128x128xi32>
    %42 = arith.sitofp %41 : vector<128x128xi32> to vector<128x128xf32>
    %43 = arith.addf %37, %42 : vector<128x128xf32>
    %44 = vector.extract_strided_slice %8 {offsets = [6, 0], sizes = [1, 128], strides = [1, 1]} : vector<8x128xi32> to vector<1x128xi32>
    %45 = vector.broadcast %44 : vector<1x128xi32> to vector<128x128xi32>
    %46 = arith.cmpi eq, %45, %2 : vector<128x128xi32>
    %47 = arith.extui %46 : vector<128x128xi1> to vector<128x128xi32>
    %48 = arith.sitofp %47 : vector<128x128xi32> to vector<128x128xf32>
    %49 = arith.addf %43, %48 : vector<128x128xf32>
    %50 = vector.extract_strided_slice %8 {offsets = [7, 0], sizes = [1, 128], strides = [1, 1]} : vector<8x128xi32> to vector<1x128xi32>
    %51 = vector.broadcast %50 : vector<1x128xi32> to vector<128x128xi32>
    %52 = arith.cmpi eq, %51, %2 : vector<128x128xi32>
    %53 = arith.extui %52 : vector<128x128xi1> to vector<128x128xi32>
    %54 = arith.sitofp %53 : vector<128x128xi32> to vector<128x128xf32>
    %55 = arith.addf %49, %54 : vector<128x128xf32>
    %c0_4 = arith.constant 0 : index
    %c0_5 = arith.constant 0 : index
    %56 = arith.index_cast %6 : i32 to index
    %57 = vector.load %arg3[%c0_4, %c0_5, %56] : memref<1x16x384xf32, #tpu.memory_space<vmem>>, vector<1x16x128xf32>
    %58 = vector.shape_cast %57 : vector<1x16x128xf32> to vector<16x128xf32>
    %c0_6 = arith.constant 0 : index
    %c0_7 = arith.constant 0 : index
    %59 = vector.load %arg8[%c0_6, %c0_7] : memref<16x128xf32, #tpu.memory_space<vmem>>, vector<16x128xf32>
    %cst_8 = arith.constant dense<0.000000e+00> : vector<16x128xf32>
    %60 = tpu.matmul %58, %55, %cst_8 {dimension_numbers = #tpu.dot_dimension_numbers<[1], [0], [0], [1], [0, 0, 1, 1], [], []>} : vector<16x128xf32>, vector<128x128xf32>, vector<16x128xf32> -> vector<16x128xf32>
    %61 = arith.addf %59, %60 : vector<16x128xf32>
    %c0_9 = arith.constant 0 : index
    %c0_10 = arith.constant 0 : index
    %62 = vector.load %arg8[%c0_9, %c0_10] : memref<16x128xf32, #tpu.memory_space<vmem>>, vector<16x128xf32>
    tpu.vector_store %arg8[%c0_9, %c0_10], %61 {strides = array<i32>} : memref<16x128xf32, #tpu.memory_space<vmem>>, vector<16x128xf32>,
    %c1_i32 = arith.constant 1 : i32
    %c128_i32_11 = arith.constant 128 : i32
    %63 = arith.muli %c1_i32, %c128_i32_11 : i32
    %64 = tpu.assume_multiple %63, 128 : i32
    %65 = vector.broadcast %64 : i32 to vector<8x128xi32>
    %66 = arith.subi %1, %65 : vector<8x128xi32>
    %67 = vector.extract_strided_slice %66 {offsets = [0, 0], sizes = [1, 128], strides = [1, 1]} : vector<8x128xi32> to vector<1x128xi32>
    %68 = vector.broadcast %67 : vector<1x128xi32> to vector<128x128xi32>
    %69 = arith.cmpi eq, %68, %2 : vector<128x128xi32>
    %70 = arith.extui %69 : vector<128x128xi1> to vector<128x128xi32>
    %71 = arith.sitofp %70 : vector<128x128xi32> to vector<128x128xf32>
    %72 = vector.extract_strided_slice %66 {offsets = [1, 0], sizes = [1, 128], strides = [1, 1]} : vector<8x128xi32> to vector<1x128xi32>
    %73 = vector.broadcast %72 : vector<1x128xi32> to vector<128x128xi32>
    %74 = arith.cmpi eq, %73, %2 : vector<128x128xi32>
    %75 = arith.extui %74 : vector<128x128xi1> to vector<128x128xi32>
    %76 = arith.sitofp %75 : vector<128x128xi32> to vector<128x128xf32>
    %77 = arith.addf %71, %76 : vector<128x128xf32>
    %78 = vector.extract_strided_slice %66 {offsets = [2, 0], sizes = [1, 128], strides = [1, 1]} : vector<8x128xi32> to vector<1x128xi32>
    %79 = vector.broadcast %78 : vector<1x128xi32> to vector<128x128xi32>
    %80 = arith.cmpi eq, %79, %2 : vector<128x128xi32>
    %81 = arith.extui %80 : vector<128x128xi1> to vector<128x128xi32>
    %82 = arith.sitofp %81 : vector<128x128xi32> to vector<128x128xf32>
    %83 = arith.addf %77, %82 : vector<128x128xf32>
    %84 = vector.extract_strided_slice %66 {offsets = [3, 0], sizes = [1, 128], strides = [1, 1]} : vector<8x128xi32> to vector<1x128xi32>
    %85 = vector.broadcast %84 : vector<1x128xi32> to vector<128x128xi32>
    %86 = arith.cmpi eq, %85, %2 : vector<128x128xi32>
    %87 = arith.extui %86 : vector<128x128xi1> to vector<128x128xi32>
    %88 = arith.sitofp %87 : vector<128x128xi32> to vector<128x128xf32>
    %89 = arith.addf %83, %88 : vector<128x128xf32>
    %90 = vector.extract_strided_slice %66 {offsets = [4, 0], sizes = [1, 128], strides = [1, 1]} : vector<8x128xi32> to vector<1x128xi32>
    %91 = vector.broadcast %90 : vector<1x128xi32> to vector<128x128xi32>
    %92 = arith.cmpi eq, %91, %2 : vector<128x128xi32>
    %93 = arith.extui %92 : vector<128x128xi1> to vector<128x128xi32>
    %94 = arith.sitofp %93 : vector<128x128xi32> to vector<128x128xf32>
    %95 = arith.addf %89, %94 : vector<128x128xf32>
    %96 = vector.extract_strided_slice %66 {offsets = [5, 0], sizes = [1, 128], strides = [1, 1]} : vector<8x128xi32> to vector<1x128xi32>
    %97 = vector.broadcast %96 : vector<1x128xi32> to vector<128x128xi32>
    %98 = arith.cmpi eq, %97, %2 : vector<128x128xi32>
    %99 = arith.extui %98 : vector<128x128xi1> to vector<128x128xi32>
    %100 = arith.sitofp %99 : vector<128x128xi32> to vector<128x128xf32>
    %101 = arith.addf %95, %100 : vector<128x128xf32>
    %102 = vector.extract_strided_slice %66 {offsets = [6, 0], sizes = [1, 128], strides = [1, 1]} : vector<8x128xi32> to vector<1x128xi32>
    %103 = vector.broadcast %102 : vector<1x128xi32> to vector<128x128xi32>
    %104 = arith.cmpi eq, %103, %2 : vector<128x128xi32>
    %105 = arith.extui %104 : vector<128x128xi1> to vector<128x128xi32>
    %106 = arith.sitofp %105 : vector<128x128xi32> to vector<128x128xf32>
    %107 = arith.addf %101, %106 : vector<128x128xf32>
    %108 = vector.extract_strided_slice %66 {offsets = [7, 0], sizes = [1, 128], strides = [1, 1]} : vector<8x128xi32> to vector<1x128xi32>
    %109 = vector.broadcast %108 : vector<1x128xi32> to vector<128x128xi32>
    %110 = arith.cmpi eq, %109, %2 : vector<128x128xi32>
    %111 = arith.extui %110 : vector<128x128xi1> to vector<128x128xi32>
    %112 = arith.sitofp %111 : vector<128x128xi32> to vector<128x128xf32>
    %113 = arith.addf %107, %112 : vector<128x128xf32>
    %c0_12 = arith.constant 0 : index
    %c0_13 = arith.constant 0 : index
    %114 = arith.index_cast %64 : i32 to index
    %115 = vector.load %arg3[%c0_12, %c0_13, %114] : memref<1x16x384xf32, #tpu.memory_space<vmem>>, vector<1x16x128xf32>
    %116 = vector.shape_cast %115 : vector<1x16x128xf32> to vector<16x128xf32>
    %c0_14 = arith.constant 0 : index
    %c0_15 = arith.constant 0 : index
    %117 = vector.load %arg8[%c0_14, %c0_15] : memref<16x128xf32, #tpu.memory_space<vmem>>, vector<16x128xf32>
    %cst_16 = arith.constant dense<0.000000e+00> : vector<16x128xf32>
    %118 = tpu.matmul %116, %113, %cst_16 {dimension_numbers = #tpu.dot_dimension_numbers<[1], [0], [0], [1], [0, 0, 1, 1], [], []>} : vector<16x128xf32>, vector<128x128xf32>, vector<16x128xf32> -> vector<16x128xf32>
    %119 = arith.addf %117, %118 : vector<16x128xf32>
    %c0_17 = arith.constant 0 : index
    %c0_18 = arith.constant 0 : index
    %120 = vector.load %arg8[%c0_17, %c0_18] : memref<16x128xf32, #tpu.memory_space<vmem>>, vector<16x128xf32>
    tpu.vector_store %arg8[%c0_17, %c0_18], %119 {strides = array<i32>} : memref<16x128xf32, #tpu.memory_space<vmem>>, vector<16x128xf32>,
    %c2_i32 = arith.constant 2 : i32
    %c128_i32_19 = arith.constant 128 : i32
    %121 = arith.muli %c2_i32, %c128_i32_19 : i32
    %122 = tpu.assume_multiple %121, 128 : i32
    %123 = vector.broadcast %122 : i32 to vector<8x128xi32>
    %124 = arith.subi %1, %123 : vector<8x128xi32>
    %125 = vector.extract_strided_slice %124 {offsets = [0, 0], sizes = [1, 128], strides = [1, 1]} : vector<8x128xi32> to vector<1x128xi32>
    %126 = vector.broadcast %125 : vector<1x128xi32> to vector<128x128xi32>
    %127 = arith.cmpi eq, %126, %2 : vector<128x128xi32>
    %128 = arith.extui %127 : vector<128x128xi1> to vector<128x128xi32>
    %129 = arith.sitofp %128 : vector<128x128xi32> to vector<128x128xf32>
    %130 = vector.extract_strided_slice %124 {offsets = [1, 0], sizes = [1, 128], strides = [1, 1]} : vector<8x128xi32> to vector<1x128xi32>
    %131 = vector.broadcast %130 : vector<1x128xi32> to vector<128x128xi32>
    %132 = arith.cmpi eq, %131, %2 : vector<128x128xi32>
    %133 = arith.extui %132 : vector<128x128xi1> to vector<128x128xi32>
    %134 = arith.sitofp %133 : vector<128x128xi32> to vector<128x128xf32>
    %135 = arith.addf %129, %134 : vector<128x128xf32>
    %136 = vector.extract_strided_slice %124 {offsets = [2, 0], sizes = [1, 128], strides = [1, 1]} : vector<8x128xi32> to vector<1x128xi32>
    %137 = vector.broadcast %136 : vector<1x128xi32> to vector<128x128xi32>
    %138 = arith.cmpi eq, %137, %2 : vector<128x128xi32>
    %139 = arith.extui %138 : vector<128x128xi1> to vector<128x128xi32>
    %140 = arith.sitofp %139 : vector<128x128xi32> to vector<128x128xf32>
    %141 = arith.addf %135, %140 : vector<128x128xf32>
    %142 = vector.extract_strided_slice %124 {offsets = [3, 0], sizes = [1, 128], strides = [1, 1]} : vector<8x128xi32> to vector<1x128xi32>
    %143 = vector.broadcast %142 : vector<1x128xi32> to vector<128x128xi32>
    %144 = arith.cmpi eq, %143, %2 : vector<128x128xi32>
    %145 = arith.extui %144 : vector<128x128xi1> to vector<128x128xi32>
    %146 = arith.sitofp %145 : vector<128x128xi32> to vector<128x128xf32>
    %147 = arith.addf %141, %146 : vector<128x128xf32>
    %148 = vector.extract_strided_slice %124 {offsets = [4, 0], sizes = [1, 128], strides = [1, 1]} : vector<8x128xi32> to vector<1x128xi32>
    %149 = vector.broadcast %148 : vector<1x128xi32> to vector<128x128xi32>
    %150 = arith.cmpi eq, %149, %2 : vector<128x128xi32>
    %151 = arith.extui %150 : vector<128x128xi1> to vector<128x128xi32>
    %152 = arith.sitofp %151 : vector<128x128xi32> to vector<128x128xf32>
    %153 = arith.addf %147, %152 : vector<128x128xf32>
    %154 = vector.extract_strided_slice %124 {offsets = [5, 0], sizes = [1, 128], strides = [1, 1]} : vector<8x128xi32> to vector<1x128xi32>
    %155 = vector.broadcast %154 : vector<1x128xi32> to vector<128x128xi32>
    %156 = arith.cmpi eq, %155, %2 : vector<128x128xi32>
    %157 = arith.extui %156 : vector<128x128xi1> to vector<128x128xi32>
    %158 = arith.sitofp %157 : vector<128x128xi32> to vector<128x128xf32>
    %159 = arith.addf %153, %158 : vector<128x128xf32>
    %160 = vector.extract_strided_slice %124 {offsets = [6, 0], sizes = [1, 128], strides = [1, 1]} : vector<8x128xi32> to vector<1x128xi32>
    %161 = vector.broadcast %160 : vector<1x128xi32> to vector<128x128xi32>
    %162 = arith.cmpi eq, %161, %2 : vector<128x128xi32>
    %163 = arith.extui %162 : vector<128x128xi1> to vector<128x128xi32>
    %164 = arith.sitofp %163 : vector<128x128xi32> to vector<128x128xf32>
    %165 = arith.addf %159, %164 : vector<128x128xf32>
    %166 = vector.extract_strided_slice %124 {offsets = [7, 0], sizes = [1, 128], strides = [1, 1]} : vector<8x128xi32> to vector<1x128xi32>
    %167 = vector.broadcast %166 : vector<1x128xi32> to vector<128x128xi32>
    %168 = arith.cmpi eq, %167, %2 : vector<128x128xi32>
    %169 = arith.extui %168 : vector<128x128xi1> to vector<128x128xi32>
    %170 = arith.sitofp %169 : vector<128x128xi32> to vector<128x128xf32>
    %171 = arith.addf %165, %170 : vector<128x128xf32>
    %c0_20 = arith.constant 0 : index
    %c0_21 = arith.constant 0 : index
    %172 = arith.index_cast %122 : i32 to index
    %173 = vector.load %arg3[%c0_20, %c0_21, %172] : memref<1x16x384xf32, #tpu.memory_space<vmem>>, vector<1x16x128xf32>
    %174 = vector.shape_cast %173 : vector<1x16x128xf32> to vector<16x128xf32>
    %c0_22 = arith.constant 0 : index
    %c0_23 = arith.constant 0 : index
    %175 = vector.load %arg8[%c0_22, %c0_23] : memref<16x128xf32, #tpu.memory_space<vmem>>, vector<16x128xf32>
    %cst_24 = arith.constant dense<0.000000e+00> : vector<16x128xf32>
    %176 = tpu.matmul %174, %171, %cst_24 {dimension_numbers = #tpu.dot_dimension_numbers<[1], [0], [0], [1], [0, 0, 1, 1], [], []>} : vector<16x128xf32>, vector<128x128xf32>, vector<16x128xf32> -> vector<16x128xf32>
    %177 = arith.addf %175, %176 : vector<16x128xf32>
    %c0_25 = arith.constant 0 : index
    %c0_26 = arith.constant 0 : index
    %178 = vector.load %arg8[%c0_25, %c0_26] : memref<16x128xf32, #tpu.memory_space<vmem>>, vector<16x128xf32>
    tpu.vector_store %arg8[%c0_25, %c0_26], %177 {strides = array<i32>} : memref<16x128xf32, #tpu.memory_space<vmem>>, vector<16x128xf32>,
    %c3_i32 = arith.constant 3 : i32
    %c128_i32_27 = arith.constant 128 : i32
    %179 = arith.muli %arg1, %c128_i32_27 : i32
    %180 = tpu.assume_multiple %179, 128 : i32
    %c0_28 = arith.constant 0 : index
    %c0_29 = arith.constant 0 : index
    %181 = arith.index_cast %180 : i32 to index
    %182 = vector.load %arg3[%c0_28, %c0_29, %181] : memref<1x16x384xf32, #tpu.memory_space<vmem>>, vector<1x16x128xf32>
    %183 = vector.shape_cast %182 : vector<1x16x128xf32> to vector<16x128xf32>
    %c0_30 = arith.constant 0 : index
    %c0_31 = arith.constant 0 : index
    %184 = memref.load %arg2[%c0_30, %c0_31] : memref<1x1xf32, #tpu.memory_space<smem>>
    %cst_32 = arith.constant 1.000000e+00 : f32
    %185 = arith.addf %cst_32, %184 : f32
    %186 = vector.broadcast %185 : f32 to vector<16x128xf32>
    %187 = arith.mulf %186, %183 : vector<16x128xf32>
    %c0_33 = arith.constant 0 : index
    %c0_34 = arith.constant 0 : index
    %188 = vector.load %arg8[%c0_33, %c0_34] : memref<16x128xf32, #tpu.memory_space<vmem>>, vector<16x128xf32>
    %189 = arith.addf %187, %188 : vector<16x128xf32>
    %c0_35 = arith.constant 0 : index
    %c0_36 = arith.constant 0 : index
    %190 = vector.load %arg5[%c0_35, %c0_36] : memref<32x16xf32, #tpu.memory_space<vmem>>, vector<32x16xf32>
    %cst_37 = arith.constant dense<0.000000e+00> : vector<32x128xf32>
    %191 = tpu.matmul %190, %189, %cst_37 {dimension_numbers = #tpu.dot_dimension_numbers<[1], [0], [0], [1], [0, 0, 1, 1], [], []>} : vector<32x16xf32>, vector<16x128xf32>, vector<32x128xf32> -> vector<32x128xf32>
    %c0_38 = arith.constant 0 : index
    %c0_39 = arith.constant 0 : index
    %192 = vector.load %arg6[%c0_38, %c0_39] : memref<32x1xf32, #tpu.memory_space<vmem>>, vector<32x1xf32>
    %193 = vector.broadcast %192 : vector<32x1xf32> to vector<32x128xf32>
    %194 = arith.addf %191, %193 : vector<32x128xf32>
    %cst_40 = arith.constant 0.000000e+00 : f32
    %195 = vector.broadcast %cst_40 : f32 to vector<32x128xf32>
    %196 = arith.maximumf %194, %195 : vector<32x128xf32>
    %c0_41 = arith.constant 0 : index
    %c0_42 = arith.constant 0 : index
    %c0_43 = arith.constant 0 : index
    %197 = vector.load %arg7[%c0_41, %c0_42, %c0_43] : memref<1x32x128xf32, #tpu.memory_space<vmem>>, vector<1x32x128xf32>
    %198 = vector.shape_cast %197 : vector<1x32x128xf32> to vector<32x128xf32>
    %199 = vector.shape_cast %196 : vector<32x128xf32> to vector<1x32x128xf32>
    tpu.vector_store %arg7[%c0_41, %c0_42, %c0_43], %199 {strides = array<i32>} : memref<1x32x128xf32, #tpu.memory_space<vmem>>, vector<1x32x128xf32>,
    return
  }
  func.func @transform_0(%arg0: i32, %arg1: i32) -> (i32, i32) {
    %c0_i32 = arith.constant 0 : i32
    %c0_i32_0 = arith.constant 0 : i32
    %c0_i32_1 = arith.constant 0 : i32
    return %c0_i32, %c0_i32_0 : i32, i32
  }
  func.func @transform_1(%arg0: i32, %arg1: i32) -> (i32, i32, i32) {
    %c0_i32 = arith.constant 0 : i32
    %c0_i32_0 = arith.constant 0 : i32
    %c0_i32_1 = arith.constant 0 : i32
    return %arg0, %c0_i32, %c0_i32_0 : i32, i32, i32
  }
  func.func @transform_2(%arg0: i32, %arg1: i32) -> (i32, i32, i32) {
    %c0_i32 = arith.constant 0 : i32
    %c0_i32_0 = arith.constant 0 : i32
    return %arg0, %c0_i32, %arg1 : i32, i32, i32
  }
  func.func @transform_3(%arg0: i32, %arg1: i32) -> (i32, i32) {
    %c0_i32 = arith.constant 0 : i32
    %c0_i32_0 = arith.constant 0 : i32
    %c0_i32_1 = arith.constant 0 : i32
    return %c0_i32, %c0_i32_0 : i32, i32
  }
  func.func @transform_4(%arg0: i32, %arg1: i32) -> (i32, i32) {
    %c0_i32 = arith.constant 0 : i32
    %c0_i32_0 = arith.constant 0 : i32
    %c0_i32_1 = arith.constant 0 : i32
    return %c0_i32, %c0_i32_0 : i32, i32
  }
  func.func @transform_5(%arg0: i32, %arg1: i32) -> (i32, i32, i32) {
    %c0_i32 = arith.constant 0 : i32
    %c0_i32_0 = arith.constant 0 : i32
    return %arg0, %c0_i32, %arg1 : i32, i32, i32
  }
}

</mosaic_0001>

<llo_original>
// kernel: tpu_custom_call.1
$region0: #{tpu_custom_call.1}
  #allocation0 [shape = 'u32[]', space=smem, size = 0x4, offset = 0x4, fixed_abs, tag = 'smem constant byte address 0x4 - core index']
  #allocation1 [shape = 'u32[72,128]{1,0:T(1,128)}', space=vmem, size = 0x9000, scoped, tag = 'internal scratch']
  #allocation2 [shape = 'f32[16,128]{1,0:T(8,128)}', space=vmem, size = 0x2000, scoped, tag = 'scratch operand']
  #allocation3 [shape = 'f32[1,1]{1,0:T(1,128)S(6)}', space=smem, size = 0x200, scoped, tag = 'scoped memory for tpu_custom_call.1']
  %s0 = inlined_call_operand.<no memory space> [shape: f32[1,1], index: 0, kind: input, shape index: {}]
  %s1 = inlined_call_operand.hbm [shape: f32[2,16,384], index: 1, kind: input, shape index: {}]
  %s2 = inlined_call_operand.vmem [shape: s32[2,8,384], index: 2, kind: input, shape index: {}]
  %s3 = inlined_call_operand.vmem [shape: f32[32,16], index: 3, kind: input, shape index: {}]
  %s4 = inlined_call_operand.vmem [shape: f32[32,1], index: 4, kind: input, shape index: {}]
  %s5 = inlined_call_operand.hbm [shape: f32[2,32,384], index: 5, kind: output, shape index: {}]
  %s6 = sld [smem:[#allocation0]]
  $region57: #{tpu_custom_call.1} parent=0
    _
  %s8 = ssub.s32 1, %s6
  %s9 = scalar_select 0, %s8, %s6
  %10 = sst [smem:[#allocation3]] %s0
  $region1: #{tpu_custom_call.1} parent=0
    #allocation4 [shape = 'u8[49152]{0}', space=vmem, size = 0xc000, scoped, tag = 'input window, operand 1']
    #allocation5 [shape = 's32[2]{0}', space=sflag, size = 0x8, scoped, tag = 'scoped memory for tpu_custom_call.1']
    #allocation6 [shape = 's32[2]{0}', space=sflag, size = 0x8, scoped, tag = 'scoped memory for tpu_custom_call.1']
    #allocation7 [shape = 'u8[32768]{0}', space=vmem, size = 0x8000, scoped, tag = 'output window, operand 0']
    %11 = vsyncpa [#allocation5], 0
    %s12 = scalar_lea.sflag [#allocation5], 1
    %13 = vsyncpa %s12, 0
    %14 = vsyncpa [#allocation6], 0
    %s15 = scalar_lea.sflag [#allocation6], 1
    %16 = vsyncpa %s15, 0
    loop: start=0, step=1, limit=8
    $region2: #{tpu_custom_call.1} parent=1 // loop_pre_header
      _
    $region3: #{tpu_custom_call.1} parent=1 // loop_header
      %s18 = sphi 0, %s22
      %p19 = scmp.ge.s32.totalorder %s18, 8
      %s25 = sphi 0, %s37
      %s26 = sphi 0, %s33
      %s27 = sphi 0, %s25
      %s28 = sphi 0, %s26
      %s29 = sphi 0, %s27
      %s30 = sphi 0, %s28
      %s38 = sphi 0, %s38
      %s40 = sphi 0, %s38
      %s41 = sphi 0, %s40
      %s55 = sphi 0, %s41
      %s61 = sphi 0, %s63
      %s64 = sphi 0, %s61
      %s65 = sphi 0, %s64
      %s81 = sphi 0, %s65
      %s89 = sphi 0, %s91
      %s92 = sphi 0, %s89
      %s93 = sphi 0, %s92
      %s109 = sphi 0, %s93
      %s113 = sphi 0, %s113
      %s115 = sphi 0, %s113
      %s116 = sphi 0, %s115
      %s130 = sphi 0, %s116
      %s134 = sphi 0, %s134
      %s136 = sphi 0, %s134
      %s137 = sphi 0, %s136
      %s151 = sphi 0, %s137
      %s159 = sphi 0, %s161
      %s162 = sphi 0, %s159
      %s163 = sphi 0, %s162
      %s179 = sphi 0, %s163
    $region4: #{tpu_custom_call.1} parent=1 // loop_header_branch
      %21 = sbr.rel (%p19) target = $region8
    $region5: #{tpu_custom_call.1} parent=1 // loop_body
      %s23 = ssub.s32 %s18, 1
      %s24 = ssub.s32 %s18, 2
      %s31 = sadd.s32 1, %s26
      %p32 = scmp.ge.s32.totalorder %s31, 3
      %s33 = scalar_select %p32, 0, %s31
      %s34 = sadd.s32 1, %s25
      %s35 = scalar_select %p32, %s34, %s25
      %p36 = scmp.ge.s32.totalorder %s35, 2
      %s37 = scalar_select %p36, 0, %s35
      %s39 = sadd.s32 %s38, 1
      %p42 = scmp.eq.s32.totalorder %s18, 5
      %p43 = scmp.ne.s32.totalorder %s38, %s40
      %p44 = scmp.eq.s32.totalorder %s18, 0
      %p45 = por %p43, %p44
      %p46 = scmp.ne.s32.totalorder %s38, %s40
      %p47 = scmp.eq.s32.totalorder %s23, 5
      %p48 = por %p46, %p47
      %p49 = scmp.ne.s32.totalorder %s40, %s41
      %p50 = scmp.eq.s32.totalorder %s23, 0
      %p51 = por %p49, %p50
      %p52 = scmp.ne.s32.totalorder %s40, %s41
      %p53 = scmp.eq.s32.totalorder %s24, 5
      %p54 = por %p52, %p53
      %p56 = scmp.ne.s32.totalorder %s41, %s55
      %p57 = scmp.eq.s32.totalorder %s24, 0
      %p58 = por %p56, %p57
      %s59 = ssub.s32 %s25, %s37
      %p60 = scmp.eq.s32.totalorder %s59, 0
      %s62 = sadd.s32 %s61, 1
      %s63 = scalar_select %p60, %s61, %s62
      %p66 = pneg %p60
      %p67 = scmp.eq.s32.totalorder %s18, 5
      %p68 = por %p66, %p67
      %p69 = scmp.ne.s32.totalorder %s61, %s64
      %p70 = scmp.eq.s32.totalorder %s18, 0
      %p71 = por %p69, %p70
      %p72 = scmp.ne.s32.totalorder %s61, %s64
      %p73 = scmp.eq.s32.totalorder %s23, 5
      %p74 = por %p72, %p73
      %p75 = scmp.ne.s32.totalorder %s64, %s65
      %p76 = scmp.eq.s32.totalorder %s23, 0
      %p77 = por %p75, %p76
      %p78 = scmp.ne.s32.totalorder %s64, %s65
      %p79 = scmp.eq.s32.totalorder %s24, 5
      %p80 = por %p78, %p79
      %p82 = scmp.ne.s32.totalorder %s65, %s81
      %p83 = scmp.eq.s32.totalorder %s24, 0
      %p84 = por %p82, %p83
      %s85 = ssub.s32 %s25, %s37
      %s86 = ssub.s32 %s26, %s33
      %s87 = sor.u32 %s85, %s86
      %p88 = scmp.eq.s32.totalorder %s87, 0
      %s90 = sadd.s32 %s89, 1
      %s91 = scalar_select %p88, %s89, %s90
      %p94 = pneg %p88
      %p95 = scmp.eq.s32.totalorder %s18, 5
      %p96 = por %p94, %p95
      %p97 = scmp.ne.s32.totalorder %s89, %s92
      %p98 = scmp.eq.s32.totalorder %s18, 0
      %p99 = por %p97, %p98
      %p100 = scmp.ne.s32.totalorder %s89, %s92
      %p101 = scmp.eq.s32.totalorder %s23, 5
      %p102 = por %p100, %p101
      %p103 = scmp.ne.s32.totalorder %s92, %s93
      %p104 = scmp.eq.s32.totalorder %s23, 0
      %p105 = por %p103, %p104
      %p106 = scmp.ne.s32.totalorder %s92, %s93
      %p107 = scmp.eq.s32.totalorder %s24, 5
      %p108 = por %p106, %p107
      %p110 = scmp.ne.s32.totalorder %s93, %s109
      %p111 = scmp.eq.s32.totalorder %s24, 0
      %p112 = por %p110, %p111
      %s114 = sadd.s32 %s113, 1
      %p117 = scmp.eq.s32.totalorder %s18, 5
      %p118 = scmp.ne.s32.totalorder %s113, %s115
      %p119 = scmp.eq.s32.totalorder %s18, 0
      %p120 = por %p118, %p119
      %p121 = scmp.ne.s32.totalorder %s113, %s115
      %p122 = scmp.eq.s32.totalorder %s23, 5
      %p123 = por %p121, %p122
      %p124 = scmp.ne.s32.totalorder %s115, %s116
      %p125 = scmp.eq.s32.totalorder %s23, 0
      %p126 = por %p124, %p125
      %p127 = scmp.ne.s32.totalorder %s115, %s116
      %p128 = scmp.eq.s32.totalorder %s24, 5
      %p129 = por %p127, %p128
      %p131 = scmp.ne.s32.totalorder %s116, %s130
      %p132 = scmp.eq.s32.totalorder %s24, 0
      %p133 = por %p131, %p132
      %s135 = sadd.s32 %s134, 1
      %p138 = scmp.eq.s32.totalorder %s18, 5
      %p139 = scmp.ne.s32.totalorder %s134, %s136
      %p140 = scmp.eq.s32.totalorder %s18, 0
      %p141 = por %p139, %p140
      %p142 = scmp.ne.s32.totalorder %s134, %s136
      %p143 = scmp.eq.s32.totalorder %s23, 5
      %p144 = por %p142, %p143
      %p145 = scmp.ne.s32.totalorder %s136, %s137
      %p146 = scmp.eq.s32.totalorder %s23, 0
      %p147 = por %p145, %p146
      %p148 = scmp.ne.s32.totalorder %s136, %s137
      %p149 = scmp.eq.s32.totalorder %s24, 5
      %p150 = por %p148, %p149
      %p152 = scmp.ne.s32.totalorder %s137, %s151
      %p153 = scmp.eq.s32.totalorder %s24, 0
      %p154 = por %p152, %p153
      %s155 = ssub.s32 %s25, %s37
      %s156 = ssub.s32 %s26, %s33
      %s157 = sor.u32 %s155, %s156
      %p158 = scmp.eq.s32.totalorder %s157, 0
      %s160 = sadd.s32 %s159, 1
      %s161 = scalar_select %p158, %s159, %s160
      %p164 = pneg %p158
      %p165 = scmp.eq.s32.totalorder %s18, 5
      %p166 = por %p164, %p165
      %p167 = scmp.ne.s32.totalorder %s159, %s162
      %p168 = scmp.eq.s32.totalorder %s18, 0
      %p169 = por %p167, %p168
      %p170 = scmp.ne.s32.totalorder %s159, %s162
      %p171 = scmp.eq.s32.totalorder %s23, 5
      %p172 = por %p170, %p171
      %p173 = scmp.ne.s32.totalorder %s162, %s163
      %p174 = scmp.eq.s32.totalorder %s23, 0
      %p175 = por %p173, %p174
      %p176 = scmp.ne.s32.totalorder %s162, %s163
      %p177 = scmp.eq.s32.totalorder %s24, 5
      %p178 = por %p176, %p177
      %p180 = scmp.ne.s32.totalorder %s163, %s179
      %p181 = scmp.eq.s32.totalorder %s24, 0
      %p182 = por %p180, %p181
      %p183 = scmp.le.s32.totalorder 1, %s18
      %p184 = scmp.lt.s32.totalorder %s18, 7
      %p185 = pnand %p183, %p184
      %p186 = pneg %p185
      // Predicated region
      $region9: #{tpu_custom_call.1} parent=5 // pred_check
        _
      $region10: #{tpu_custom_call.1} parent=5 // pred_check_branch
        %188 = sbr.rel (%p185) target = $region12
      $region11: #{tpu_custom_call.1} parent=5 // pred_region
        %s189 = ssub.s32 %s18, 1
        // Predicated region
        $region13: #{tpu_custom_call.1} parent=11 // pred_check
          %p190 = pneg %p51
        $region14: #{tpu_custom_call.1} parent=11 // pred_check_branch
          %192 = sbr.rel (%p190) target = $region16
        $region15: #{tpu_custom_call.1} parent=11 // pred_region
          _
        $region16: #{tpu_custom_call.1} parent=11 // pred_fallthru
          _
        // Predicated region
        $region17: #{tpu_custom_call.1} parent=11 // pred_check
          %p193 = pneg %p126
        $region18: #{tpu_custom_call.1} parent=11 // pred_check_branch
          %195 = sbr.rel (%p193) target = $region20
        $region19: #{tpu_custom_call.1} parent=11 // pred_region
          _
        $region20: #{tpu_custom_call.1} parent=11 // pred_fallthru
          _
        // Predicated region
        $region21: #{tpu_custom_call.1} parent=11 // pred_check
          %p196 = pneg %p147
        $region22: #{tpu_custom_call.1} parent=11 // pred_check_branch
          %198 = sbr.rel (%p196) target = $region24
        $region23: #{tpu_custom_call.1} parent=11 // pred_region
          _
        $region24: #{tpu_custom_call.1} parent=11 // pred_fallthru
          _
      $region12: #{tpu_custom_call.1} parent=5 // pred_fallthru
        _
      %p199 = scmp.lt.s32.totalorder %s18, 6
      // Predicated region
      $region25: #{tpu_custom_call.1} parent=5 // pred_check
        %p200 = pneg %p199
      $region26: #{tpu_custom_call.1} parent=5 // pred_check_branch
        %202 = sbr.rel (%p200) target = $region28
      $region27: #{tpu_custom_call.1} parent=5 // pred_region
        // Predicated region
        $region29: #{tpu_custom_call.1} parent=27 // pred_check
          %p203 = pneg %p71
        $region30: #{tpu_custom_call.1} parent=27 // pred_check_branch
          %205 = sbr.rel (%p203) target = $region32
        $region31: #{tpu_custom_call.1} parent=27 // pred_region
          %s206 = sand.u32 %s61, 1
          %s207 = scalar_lea.sflag [#allocation5], %s206
          %s208 = sand.u32 %s61, 1
          %s209 = smul.addr %s208, 48
          %s210 = scalar_lea.vmem [#allocation4], %s209
          %212 = vsyncadd %s207, 0
          %s213 = smul.addr %s25, 6
          %s214 = smul.addr %s213, 8
          %s215 = scalar_lea.hbm %s1, %s214
          %s216 = sshll.u32 %s215, 4
          %s217 = int_to_ptr.hbm [resolvable:$true] %s216
          %s218 = sshll.u32 %s210, 4
          %s219 = int_to_ptr.vmem [resolvable:$true] %s218
          %224 = dma.hbm_to_vmem [thread:$0]  %s217, 768, %s219, %s207, 384, 384, 24
        $region32: #{tpu_custom_call.1} parent=27 // pred_fallthru
          _
        // Predicated region
        $region33: #{tpu_custom_call.1} parent=27 // pred_check
          %p225 = pneg %p99
        $region34: #{tpu_custom_call.1} parent=27 // pred_check_branch
          %227 = sbr.rel (%p225) target = $region36
        $region35: #{tpu_custom_call.1} parent=27 // pred_region
          %p228 = scmp.lt.s32.totalorder %s25, 1
          %s229 = scalar_select %p228, %s25, 1
          %p230 = scmp.lt.s32.totalorder %s26, 2
          %s231 = scalar_select %p230, %s26, 2
          %s232 = smul.addr %s229, 3
          %s233 = sadd.s32 %s231, %s232
          %s234 = smul.addr %s233, 8
          %s235 = scalar_lea.vmem %s2, %s234
        $region36: #{tpu_custom_call.1} parent=27 // pred_fallthru
          _
      $region28: #{tpu_custom_call.1} parent=5 // pred_fallthru
        _
      %p236 = scmp.le.s32.totalorder 1, %s18
      %p237 = scmp.lt.s32.totalorder %s18, 7
      %p238 = pnand %p236, %p237
      %p239 = pneg %p238
      // Predicated region
      $region37: #{tpu_custom_call.1} parent=5 // pred_check
        _
      $region38: #{tpu_custom_call.1} parent=5 // pred_check_branch
        %241 = sbr.rel (%p238) target = $region40
      $region39: #{tpu_custom_call.1} parent=5 // pred_region
        %s242 = ssub.s32 %s18, 1
        %s243 = sand.u32 %s64, 1
        %s244 = scalar_lea.sflag [#allocation5], %s243
        %s245 = sand.u32 %s64, 1
        %s246 = smul.addr %s245, 48
        %s247 = scalar_lea.vmem [#allocation4], %s246
        // Predicated region
        $region41: #{tpu_custom_call.1} parent=39 // pred_check
          %p248 = pneg %p77
        $region42: #{tpu_custom_call.1} parent=39 // pred_check_branch
          %250 = sbr.rel (%p248) target = $region44
        $region43: #{tpu_custom_call.1} parent=39 // pred_region
          %252 = dma.done %s244, 768
        $region44: #{tpu_custom_call.1} parent=39 // pred_fallthru
          _
        %p253 = pneg %p51
        %p254 = pneg %p48
        %s255 = sand.u32 %s64, 1
        %s256 = scalar_lea.sflag [#allocation5], %s255
        %s257 = sand.u32 %s64, 1
        %s258 = smul.addr %s257, 48
        %s259 = scalar_lea.vmem [#allocation4], %s258
        %p260 = pneg %p77
        %p261 = pneg %p74
        %p262 = scmp.lt.s32.totalorder %s27, 1
        %s263 = scalar_select %p262, %s27, 1
        %p264 = scmp.lt.s32.totalorder %s28, 2
        %s265 = scalar_select %p264, %s28, 2
        %s266 = smul.addr %s263, 3
        %s267 = sadd.s32 %s265, %s266
        %s268 = smul.addr %s267, 8
        %s269 = scalar_lea.vmem %s2, %s268
        %p270 = pneg %p105
        %p271 = pneg %p102
        %p272 = pneg %p126
        %p273 = pneg %p123
        %p274 = pneg %p147
        %p275 = pneg %p144
        %p276 = pneg %p175
        %p277 = pneg %p172
        %s278 = sand.u32 %s162, 1
        %s279 = scalar_lea.sflag [#allocation6], %s278
        %s280 = sand.u32 %s162, 1
        %s281 = smul.addr %s280, 32
        %s282 = scalar_lea.vmem [#allocation7], %s281
        %p283 = scmp.lt.s32.totalorder %s27, 1
        %s284 = scalar_select %p283, %s27, 1
        %p285 = scmp.lt.s32.totalorder %s28, 2
        %s286 = scalar_select %p285, %s28, 2
        %s287 = smul.addr %s284, 3
        %s288 = sadd.s32 %s286, %s287
        %s289 = smul.addr %s288, 8
        %s290 = scalar_lea.vmem %s2, %s289
        %v291 = vld [vmem:[%s290] sm:$0xff]
        %v292 = vlaneseq
        %v293 = vshrl.u32 %v292, 7
        %v294 = vadd.s32 %v293, 8
        %v295 = vadd.s32 %v293, 16
        %v296 = vadd.s32 %v293, 24
        %v297 = vadd.s32 %v293, 32
        %v298 = vadd.s32 %v293, 40
        %v299 = vadd.s32 %v293, 48
        %v300 = vadd.s32 %v293, 56
        %v301 = vadd.s32 %v293, 64
        %v302 = vadd.s32 %v293, 72
        %v303 = vadd.s32 %v293, 80
        %v304 = vadd.s32 %v293, 88
        %v305 = vadd.s32 %v293, 96
        %v306 = vadd.s32 %v293, 104
        %v307 = vadd.s32 %v293, 112
        %v308 = vadd.s32 %v293, 120
        %309 = vst [vmem:[#allocation2] sm:$0xff] 0.0
        %310 = vst [vmem:[#allocation2 + $0x8] sm:$0xff] 0.0
        %v311 = vstv 0
        %v312 = vsub.s32 %v291, %v311
        %v313 = vperm.slane %v312, 0
        %vm314 = vcmp.eq.s32.totalorder %v313, %v293
        %vm315 = vcmp.eq.s32.totalorder %v313, %v294
        %vm316 = vcmp.eq.s32.totalorder %v313, %v295
        %vm317 = vcmp.eq.s32.totalorder %v313, %v296
        %vm318 = vcmp.eq.s32.totalorder %v313, %v297
        %vm319 = vcmp.eq.s32.totalorder %v313, %v298
        %vm320 = vcmp.eq.s32.totalorder %v313, %v299
        %vm321 = vcmp.eq.s32.totalorder %v313, %v300
        %vm322 = vcmp.eq.s32.totalorder %v313, %v301
        %vm323 = vcmp.eq.s32.totalorder %v313, %v302
        %vm324 = vcmp.eq.s32.totalorder %v313, %v303
        %vm325 = vcmp.eq.s32.totalorder %v313, %v304
        %vm326 = vcmp.eq.s32.totalorder %v313, %v305
        %vm327 = vcmp.eq.s32.totalorder %v313, %v306
        %vm328 = vcmp.eq.s32.totalorder %v313, %v307
        %vm329 = vcmp.eq.s32.totalorder %v313, %v308
        %v330 = vsel %vm314, 1, 0
        %v331 = vsel %vm315, 1, 0
        %v332 = vsel %vm316, 1, 0
        %v333 = vsel %vm317, 1, 0
        %v334 = vsel %vm318, 1, 0
        %v335 = vsel %vm319, 1, 0
        %v336 = vsel %vm320, 1, 0
        %v337 = vsel %vm321, 1, 0
        %v338 = vsel %vm322, 1, 0
        %v339 = vsel %vm323, 1, 0
        %v340 = vsel %vm324, 1, 0
        %v341 = vsel %vm325, 1, 0
        %v342 = vsel %vm326, 1, 0
        %v343 = vsel %vm327, 1, 0
        %v344 = vsel %vm328, 1, 0
        %v345 = vsel %vm329, 1, 0
        %v346 = vcvt.s32.f32 %v330
        %v347 = vcvt.s32.f32 %v331
        %v348 = vcvt.s32.f32 %v332
        %v349 = vcvt.s32.f32 %v333
        %v350 = vcvt.s32.f32 %v334
        %v351 = vcvt.s32.f32 %v335
        %v352 = vcvt.s32.f32 %v336
        %v353 = vcvt.s32.f32 %v337
        %v354 = vcvt.s32.f32 %v338
        %v355 = vcvt.s32.f32 %v339
        %v356 = vcvt.s32.f32 %v340
        %v357 = vcvt.s32.f32 %v341
        %v358 = vcvt.s32.f32 %v342
        %v359 = vcvt.s32.f32 %v343
        %v360 = vcvt.s32.f32 %v344
        %v361 = vcvt.s32.f32 %v345
        %v362 = vperm.slane %v312, 1
        %vm363 = vcmp.eq.s32.totalorder %v362, %v293
        %vm364 = vcmp.eq.s32.totalorder %v362, %v294
        %vm365 = vcmp.eq.s32.totalorder %v362, %v295
        %vm366 = vcmp.eq.s32.totalorder %v362, %v296
        %vm367 = vcmp.eq.s32.totalorder %v362, %v297
        %vm368 = vcmp.eq.s32.totalorder %v362, %v298
        %vm369 = vcmp.eq.s32.totalorder %v362, %v299
        %vm370 = vcmp.eq.s32.totalorder %v362, %v300
        %vm371 = vcmp.eq.s32.totalorder %v362, %v301
        %vm372 = vcmp.eq.s32.totalorder %v362, %v302
        %vm373 = vcmp.eq.s32.totalorder %v362, %v303
        %vm374 = vcmp.eq.s32.totalorder %v362, %v304
        %vm375 = vcmp.eq.s32.totalorder %v362, %v305
        %vm376 = vcmp.eq.s32.totalorder %v362, %v306
        %vm377 = vcmp.eq.s32.totalorder %v362, %v307
        %vm378 = vcmp.eq.s32.totalorder %v362, %v308
        %v379 = vsel %vm363, 1, 0
        %v380 = vsel %vm364, 1, 0
        %v381 = vsel %vm365, 1, 0
        %v382 = vsel %vm366, 1, 0
        %v383 = vsel %vm367, 1, 0
        %v384 = vsel %vm368, 1, 0
        %v385 = vsel %vm369, 1, 0
        %v386 = vsel %vm370, 1, 0
        %v387 = vsel %vm371, 1, 0
        %v388 = vsel %vm372, 1, 0
        %v389 = vsel %vm373, 1, 0
        %v390 = vsel %vm374, 1, 0
        %v391 = vsel %vm375, 1, 0
        %v392 = vsel %vm376, 1, 0
        %v393 = vsel %vm377, 1, 0
        %v394 = vsel %vm378, 1, 0
        %v395 = vcvt.s32.f32 %v379
        %v396 = vcvt.s32.f32 %v380
        %v397 = vcvt.s32.f32 %v381
        %v398 = vcvt.s32.f32 %v382
        %v399 = vcvt.s32.f32 %v383
        %v400 = vcvt.s32.f32 %v384
        %v401 = vcvt.s32.f32 %v385
        %v402 = vcvt.s32.f32 %v386
        %v403 = vcvt.s32.f32 %v387
        %v404 = vcvt.s32.f32 %v388
        %v405 = vcvt.s32.f32 %v389
        %v406 = vcvt.s32.f32 %v390
        %v407 = vcvt.s32.f32 %v391
        %v408 = vcvt.s32.f32 %v392
        %v409 = vcvt.s32.f32 %v393
        %v410 = vcvt.s32.f32 %v394
        %v411 = vadd.f32 %v346, %v395
        %v412 = vadd.f32 %v347, %v396
        %v413 = vadd.f32 %v348, %v397
        %v414 = vadd.f32 %v349, %v398
        %v415 = vadd.f32 %v350, %v399
        %v416 = vadd.f32 %v351, %v400
        %v417 = vadd.f32 %v352, %v401
        %v418 = vadd.f32 %v353, %v402
        %v419 = vadd.f32 %v354, %v403
        %v420 = vadd.f32 %v355, %v404
        %v421 = vadd.f32 %v356, %v405
        %v422 = vadd.f32 %v357, %v406
        %v423 = vadd.f32 %v358, %v407
        %v424 = vadd.f32 %v359, %v408
        %v425 = vadd.f32 %v360, %v409
        %v426 = vadd.f32 %v361, %v410
        %v427 = vperm.slane %v312, 2
        %vm428 = vcmp.eq.s32.totalorder %v427, %v293
        %vm429 = vcmp.eq.s32.totalorder %v427, %v294
        %vm430 = vcmp.eq.s32.totalorder %v427, %v295
        %vm431 = vcmp.eq.s32.totalorder %v427, %v296
        %vm432 = vcmp.eq.s32.totalorder %v427, %v297
        %vm433 = vcmp.eq.s32.totalorder %v427, %v298
        %vm434 = vcmp.eq.s32.totalorder %v427, %v299
        %vm435 = vcmp.eq.s32.totalorder %v427, %v300
        %vm436 = vcmp.eq.s32.totalorder %v427, %v301
        %vm437 = vcmp.eq.s32.totalorder %v427, %v302
        %vm438 = vcmp.eq.s32.totalorder %v427, %v303
        %vm439 = vcmp.eq.s32.totalorder %v427, %v304
        %vm440 = vcmp.eq.s32.totalorder %v427, %v305
        %vm441 = vcmp.eq.s32.totalorder %v427, %v306
        %vm442 = vcmp.eq.s32.totalorder %v427, %v307
        %vm443 = vcmp.eq.s32.totalorder %v427, %v308
        %v444 = vsel %vm428, 1, 0
        %v445 = vsel %vm429, 1, 0
        %v446 = vsel %vm430, 1, 0
        %v447 = vsel %vm431, 1, 0
        %v448 = vsel %vm432, 1, 0
        %v449 = vsel %vm433, 1, 0
        %v450 = vsel %vm434, 1, 0
        %v451 = vsel %vm435, 1, 0
        %v452 = vsel %vm436, 1, 0
        %v453 = vsel %vm437, 1, 0
        %v454 = vsel %vm438, 1, 0
        %v455 = vsel %vm439, 1, 0
        %v456 = vsel %vm440, 1, 0
        %v457 = vsel %vm441, 1, 0
        %v458 = vsel %vm442, 1, 0
        %v459 = vsel %vm443, 1, 0
        %v460 = vcvt.s32.f32 %v444
        %v461 = vcvt.s32.f32 %v445
        %v462 = vcvt.s32.f32 %v446
        %v463 = vcvt.s32.f32 %v447
        %v464 = vcvt.s32.f32 %v448
        %v465 = vcvt.s32.f32 %v449
        %v466 = vcvt.s32.f32 %v450
        %v467 = vcvt.s32.f32 %v451
        %v468 = vcvt.s32.f32 %v452
        %v469 = vcvt.s32.f32 %v453
        %v470 = vcvt.s32.f32 %v454
        %v471 = vcvt.s32.f32 %v455
        %v472 = vcvt.s32.f32 %v456
        %v473 = vcvt.s32.f32 %v457
        %v474 = vcvt.s32.f32 %v458
        %v475 = vcvt.s32.f32 %v459
        %v476 = vadd.f32 %v411, %v460
        %v477 = vadd.f32 %v412, %v461
        %v478 = vadd.f32 %v413, %v462
        %v479 = vadd.f32 %v414, %v463
        %v480 = vadd.f32 %v415, %v464
        %v481 = vadd.f32 %v416, %v465
        %v482 = vadd.f32 %v417, %v466
        %v483 = vadd.f32 %v418, %v467
        %v484 = vadd.f32 %v419, %v468
        %v485 = vadd.f32 %v420, %v469
        %v486 = vadd.f32 %v421, %v470
        %v487 = vadd.f32 %v422, %v471
        %v488 = vadd.f32 %v423, %v472
        %v489 = vadd.f32 %v424, %v473
        %v490 = vadd.f32 %v425, %v474
        %v491 = vadd.f32 %v426, %v475
        %v492 = vperm.slane %v312, 3
        %vm493 = vcmp.eq.s32.totalorder %v492, %v293
        %vm494 = vcmp.eq.s32.totalorder %v492, %v294
        %vm495 = vcmp.eq.s32.totalorder %v492, %v295
        %vm496 = vcmp.eq.s32.totalorder %v492, %v296
        %vm497 = vcmp.eq.s32.totalorder %v492, %v297
        %vm498 = vcmp.eq.s32.totalorder %v492, %v298
        %vm499 = vcmp.eq.s32.totalorder %v492, %v299
        %vm500 = vcmp.eq.s32.totalorder %v492, %v300
        %vm501 = vcmp.eq.s32.totalorder %v492, %v301
        %vm502 = vcmp.eq.s32.totalorder %v492, %v302
        %vm503 = vcmp.eq.s32.totalorder %v492, %v303
        %vm504 = vcmp.eq.s32.totalorder %v492, %v304
        %vm505 = vcmp.eq.s32.totalorder %v492, %v305
        %vm506 = vcmp.eq.s32.totalorder %v492, %v306
        %vm507 = vcmp.eq.s32.totalorder %v492, %v307
        %vm508 = vcmp.eq.s32.totalorder %v492, %v308
        %v509 = vsel %vm493, 1, 0
        %v510 = vsel %vm494, 1, 0
        %v511 = vsel %vm495, 1, 0
        %v512 = vsel %vm496, 1, 0
        %v513 = vsel %vm497, 1, 0
        %v514 = vsel %vm498, 1, 0
        %v515 = vsel %vm499, 1, 0
        %v516 = vsel %vm500, 1, 0
        %v517 = vsel %vm501, 1, 0
        %v518 = vsel %vm502, 1, 0
        %v519 = vsel %vm503, 1, 0
        %v520 = vsel %vm504, 1, 0
        %v521 = vsel %vm505, 1, 0
        %v522 = vsel %vm506, 1, 0
        %v523 = vsel %vm507, 1, 0
        %v524 = vsel %vm508, 1, 0
        %v525 = vcvt.s32.f32 %v509
        %v526 = vcvt.s32.f32 %v510
        %v527 = vcvt.s32.f32 %v511
        %v528 = vcvt.s32.f32 %v512
        %v529 = vcvt.s32.f32 %v513
        %v530 = vcvt.s32.f32 %v514
        %v531 = vcvt.s32.f32 %v515
        %v532 = vcvt.s32.f32 %v516
        %v533 = vcvt.s32.f32 %v517
        %v534 = vcvt.s32.f32 %v518
        %v535 = vcvt.s32.f32 %v519
        %v536 = vcvt.s32.f32 %v520
        %v537 = vcvt.s32.f32 %v521
        %v538 = vcvt.s32.f32 %v522
        %v539 = vcvt.s32.f32 %v523
        %v540 = vcvt.s32.f32 %v524
        %v541 = vadd.f32 %v476, %v525
        %v542 = vadd.f32 %v477, %v526
        %v543 = vadd.f32 %v478, %v527
        %v544 = vadd.f32 %v479, %v528
        %v545 = vadd.f32 %v480, %v529
        %v546 = vadd.f32 %v481, %v530
        %v547 = vadd.f32 %v482, %v531
        %v548 = vadd.f32 %v483, %v532
        %v549 = vadd.f32 %v484, %v533
        %v550 = vadd.f32 %v485, %v534
        %v551 = vadd.f32 %v486, %v535
        %v552 = vadd.f32 %v487, %v536
        %v553 = vadd.f32 %v488, %v537
        %v554 = vadd.f32 %v489, %v538
        %v555 = vadd.f32 %v490, %v539
        %v556 = vadd.f32 %v491, %v540
        %v557 = vperm.slane %v312, 4
        %vm558 = vcmp.eq.s32.totalorder %v557, %v293
        %vm559 = vcmp.eq.s32.totalorder %v557, %v294
        %vm560 = vcmp.eq.s32.totalorder %v557, %v295
        %vm561 = vcmp.eq.s32.totalorder %v557, %v296
        %vm562 = vcmp.eq.s32.totalorder %v557, %v297
        %vm563 = vcmp.eq.s32.totalorder %v557, %v298
        %vm564 = vcmp.eq.s32.totalorder %v557, %v299
        %vm565 = vcmp.eq.s32.totalorder %v557, %v300
        %vm566 = vcmp.eq.s32.totalorder %v557, %v301
        %vm567 = vcmp.eq.s32.totalorder %v557, %v302
        %vm568 = vcmp.eq.s32.totalorder %v557, %v303
        %vm569 = vcmp.eq.s32.totalorder %v557, %v304
        %vm570 = vcmp.eq.s32.totalorder %v557, %v305
        %vm571 = vcmp.eq.s32.totalorder %v557, %v306
        %vm572 = vcmp.eq.s32.totalorder %v557, %v307
        %vm573 = vcmp.eq.s32.totalorder %v557, %v308
        %v574 = vsel %vm558, 1, 0
        %v575 = vsel %vm559, 1, 0
        %v576 = vsel %vm560, 1, 0
        %v577 = vsel %vm561, 1, 0
        %v578 = vsel %vm562, 1, 0
        %v579 = vsel %vm563, 1, 0
        %v580 = vsel %vm564, 1, 0
        %v581 = vsel %vm565, 1, 0
        %v582 = vsel %vm566, 1, 0
        %v583 = vsel %vm567, 1, 0
        %v584 = vsel %vm568, 1, 0
        %v585 = vsel %vm569, 1, 0
        %v586 = vsel %vm570, 1, 0
        %v587 = vsel %vm571, 1, 0
        %v588 = vsel %vm572, 1, 0
        %v589 = vsel %vm573, 1, 0
        %v590 = vcvt.s32.f32 %v574
        %v591 = vcvt.s32.f32 %v575
        %v592 = vcvt.s32.f32 %v576
        %v593 = vcvt.s32.f32 %v577
        %v594 = vcvt.s32.f32 %v578
        %v595 = vcvt.s32.f32 %v579
        %v596 = vcvt.s32.f32 %v580
        %v597 = vcvt.s32.f32 %v581
        %v598 = vcvt.s32.f32 %v582
        %v599 = vcvt.s32.f32 %v583
        %v600 = vcvt.s32.f32 %v584
        %v601 = vcvt.s32.f32 %v585
        %v602 = vcvt.s32.f32 %v586
        %v603 = vcvt.s32.f32 %v587
        %v604 = vcvt.s32.f32 %v588
        %v605 = vcvt.s32.f32 %v589
        %v606 = vadd.f32 %v541, %v590
        %v607 = vadd.f32 %v542, %v591
        %v608 = vadd.f32 %v543, %v592
        %v609 = vadd.f32 %v544, %v593
        %v610 = vadd.f32 %v545, %v594
        %v611 = vadd.f32 %v546, %v595
        %v612 = vadd.f32 %v547, %v596
        %v613 = vadd.f32 %v548, %v597
        %v614 = vadd.f32 %v549, %v598
        %v615 = vadd.f32 %v550, %v599
        %v616 = vadd.f32 %v551, %v600
        %v617 = vadd.f32 %v552, %v601
        %v618 = vadd.f32 %v553, %v602
        %v619 = vadd.f32 %v554, %v603
        %v620 = vadd.f32 %v555, %v604
        %v621 = vadd.f32 %v556, %v605
        %v622 = vperm.slane %v312, 5
        %vm623 = vcmp.eq.s32.totalorder %v622, %v293
        %vm624 = vcmp.eq.s32.totalorder %v622, %v294
        %vm625 = vcmp.eq.s32.totalorder %v622, %v295
        %vm626 = vcmp.eq.s32.totalorder %v622, %v296
        %vm627 = vcmp.eq.s32.totalorder %v622, %v297
        %vm628 = vcmp.eq.s32.totalorder %v622, %v298
        %vm629 = vcmp.eq.s32.totalorder %v622, %v299
        %vm630 = vcmp.eq.s32.totalorder %v622, %v300
        %vm631 = vcmp.eq.s32.totalorder %v622, %v301
        %vm632 = vcmp.eq.s32.totalorder %v622, %v302
        %vm633 = vcmp.eq.s32.totalorder %v622, %v303
        %vm634 = vcmp.eq.s32.totalorder %v622, %v304
        %vm635 = vcmp.eq.s32.totalorder %v622, %v305
        %vm636 = vcmp.eq.s32.totalorder %v622, %v306
        %vm637 = vcmp.eq.s32.totalorder %v622, %v307
        %vm638 = vcmp.eq.s32.totalorder %v622, %v308
        %v639 = vsel %vm623, 1, 0
        %v640 = vsel %vm624, 1, 0
        %v641 = vsel %vm625, 1, 0
        %v642 = vsel %vm626, 1, 0
        %v643 = vsel %vm627, 1, 0
        %v644 = vsel %vm628, 1, 0
        %v645 = vsel %vm629, 1, 0
        %v646 = vsel %vm630, 1, 0
        %v647 = vsel %vm631, 1, 0
        %v648 = vsel %vm632, 1, 0
        %v649 = vsel %vm633, 1, 0
        %v650 = vsel %vm634, 1, 0
        %v651 = vsel %vm635, 1, 0
        %v652 = vsel %vm636, 1, 0
        %v653 = vsel %vm637, 1, 0
        %v654 = vsel %vm638, 1, 0
        %v655 = vcvt.s32.f32 %v639
        %v656 = vcvt.s32.f32 %v640
        %v657 = vcvt.s32.f32 %v641
        %v658 = vcvt.s32.f32 %v642
        %v659 = vcvt.s32.f32 %v643
        %v660 = vcvt.s32.f32 %v644
        %v661 = vcvt.s32.f32 %v645
        %v662 = vcvt.s32.f32 %v646
        %v663 = vcvt.s32.f32 %v647
        %v664 = vcvt.s32.f32 %v648
        %v665 = vcvt.s32.f32 %v649
        %v666 = vcvt.s32.f32 %v650
        %v667 = vcvt.s32.f32 %v651
        %v668 = vcvt.s32.f32 %v652
        %v669 = vcvt.s32.f32 %v653
        %v670 = vcvt.s32.f32 %v654
        %v671 = vadd.f32 %v606, %v655
        %v672 = vadd.f32 %v607, %v656
        %v673 = vadd.f32 %v608, %v657
        %v674 = vadd.f32 %v609, %v658
        %v675 = vadd.f32 %v610, %v659
        %v676 = vadd.f32 %v611, %v660
        %v677 = vadd.f32 %v612, %v661
        %v678 = vadd.f32 %v613, %v662
        %v679 = vadd.f32 %v614, %v663
        %v680 = vadd.f32 %v615, %v664
        %v681 = vadd.f32 %v616, %v665
        %v682 = vadd.f32 %v617, %v666
        %v683 = vadd.f32 %v618, %v667
        %v684 = vadd.f32 %v619, %v668
        %v685 = vadd.f32 %v620, %v669
        %v686 = vadd.f32 %v621, %v670
        %v687 = vperm.slane %v312, 6
        %vm688 = vcmp.eq.s32.totalorder %v687, %v293
        %vm689 = vcmp.eq.s32.totalorder %v687, %v294
        %vm690 = vcmp.eq.s32.totalorder %v687, %v295
        %vm691 = vcmp.eq.s32.totalorder %v687, %v296
        %vm692 = vcmp.eq.s32.totalorder %v687, %v297
        %vm693 = vcmp.eq.s32.totalorder %v687, %v298
        %vm694 = vcmp.eq.s32.totalorder %v687, %v299
        %vm695 = vcmp.eq.s32.totalorder %v687, %v300
        %vm696 = vcmp.eq.s32.totalorder %v687, %v301
        %vm697 = vcmp.eq.s32.totalorder %v687, %v302
        %vm698 = vcmp.eq.s32.totalorder %v687, %v303
        %vm699 = vcmp.eq.s32.totalorder %v687, %v304
        %vm700 = vcmp.eq.s32.totalorder %v687, %v305
        %vm701 = vcmp.eq.s32.totalorder %v687, %v306
        %vm702 = vcmp.eq.s32.totalorder %v687, %v307
        %vm703 = vcmp.eq.s32.totalorder %v687, %v308
        %v704 = vsel %vm688, 1, 0
        %v705 = vsel %vm689, 1, 0
        %v706 = vsel %vm690, 1, 0
        %v707 = vsel %vm691, 1, 0
        %v708 = vsel %vm692, 1, 0
        %v709 = vsel %vm693, 1, 0
        %v710 = vsel %vm694, 1, 0
        %v711 = vsel %vm695, 1, 0
        %v712 = vsel %vm696, 1, 0
        %v713 = vsel %vm697, 1, 0
        %v714 = vsel %vm698, 1, 0
        %v715 = vsel %vm699, 1, 0
        %v716 = vsel %vm700, 1, 0
        %v717 = vsel %vm701, 1, 0
        %v718 = vsel %vm702, 1, 0
        %v719 = vsel %vm703, 1, 0
        %v720 = vcvt.s32.f32 %v704
        %v721 = vcvt.s32.f32 %v705
        %v722 = vcvt.s32.f32 %v706
        %v723 = vcvt.s32.f32 %v707
        %v724 = vcvt.s32.f32 %v708
        %v725 = vcvt.s32.f32 %v709
        %v726 = vcvt.s32.f32 %v710
        %v727 = vcvt.s32.f32 %v711
        %v728 = vcvt.s32.f32 %v712
        %v729 = vcvt.s32.f32 %v713
        %v730 = vcvt.s32.f32 %v714
        %v731 = vcvt.s32.f32 %v715
        %v732 = vcvt.s32.f32 %v716
        %v733 = vcvt.s32.f32 %v717
        %v734 = vcvt.s32.f32 %v718
        %v735 = vcvt.s32.f32 %v719
        %v736 = vadd.f32 %v671, %v720
        %v737 = vadd.f32 %v672, %v721
        %v738 = vadd.f32 %v673, %v722
        %v739 = vadd.f32 %v674, %v723
        %v740 = vadd.f32 %v675, %v724
        %v741 = vadd.f32 %v676, %v725
        %v742 = vadd.f32 %v677, %v726
        %v743 = vadd.f32 %v678, %v727
        %v744 = vadd.f32 %v679, %v728
        %v745 = vadd.f32 %v680, %v729
        %v746 = vadd.f32 %v681, %v730
        %v747 = vadd.f32 %v682, %v731
        %v748 = vadd.f32 %v683, %v732
        %v749 = vadd.f32 %v684, %v733
        %v750 = vadd.f32 %v685, %v734
        %v751 = vadd.f32 %v686, %v735
        %v752 = vperm.slane %v312, 7
        %vm753 = vcmp.eq.s32.totalorder %v752, %v293
        %vm754 = vcmp.eq.s32.totalorder %v752, %v294
        %vm755 = vcmp.eq.s32.totalorder %v752, %v295
        %vm756 = vcmp.eq.s32.totalorder %v752, %v296
        %vm757 = vcmp.eq.s32.totalorder %v752, %v297
        %vm758 = vcmp.eq.s32.totalorder %v752, %v298
        %vm759 = vcmp.eq.s32.totalorder %v752, %v299
        %vm760 = vcmp.eq.s32.totalorder %v752, %v300
        %vm761 = vcmp.eq.s32.totalorder %v752, %v301
        %vm762 = vcmp.eq.s32.totalorder %v752, %v302
        %vm763 = vcmp.eq.s32.totalorder %v752, %v303
        %vm764 = vcmp.eq.s32.totalorder %v752, %v304
        %vm765 = vcmp.eq.s32.totalorder %v752, %v305
        %vm766 = vcmp.eq.s32.totalorder %v752, %v306
        %vm767 = vcmp.eq.s32.totalorder %v752, %v307
        %vm768 = vcmp.eq.s32.totalorder %v752, %v308
        %v769 = vsel %vm753, 1, 0
        %v770 = vsel %vm754, 1, 0
        %v771 = vsel %vm755, 1, 0
        %v772 = vsel %vm756, 1, 0
        %v773 = vsel %vm757, 1, 0
        %v774 = vsel %vm758, 1, 0
        %v775 = vsel %vm759, 1, 0
        %v776 = vsel %vm760, 1, 0
        %v777 = vsel %vm761, 1, 0
        %v778 = vsel %vm762, 1, 0
        %v779 = vsel %vm763, 1, 0
        %v780 = vsel %vm764, 1, 0
        %v781 = vsel %vm765, 1, 0
        %v782 = vsel %vm766, 1, 0
        %v783 = vsel %vm767, 1, 0
        %v784 = vsel %vm768, 1, 0
        %v785 = vcvt.s32.f32 %v769
        %v786 = vcvt.s32.f32 %v770
        %v787 = vcvt.s32.f32 %v771
        %v788 = vcvt.s32.f32 %v772
        %v789 = vcvt.s32.f32 %v773
        %v790 = vcvt.s32.f32 %v774
        %v791 = vcvt.s32.f32 %v775
        %v792 = vcvt.s32.f32 %v776
        %v793 = vcvt.s32.f32 %v777
        %v794 = vcvt.s32.f32 %v778
        %v795 = vcvt.s32.f32 %v779
        %v796 = vcvt.s32.f32 %v780
        %v797 = vcvt.s32.f32 %v781
        %v798 = vcvt.s32.f32 %v782
        %v799 = vcvt.s32.f32 %v783
        %v800 = vcvt.s32.f32 %v784
        %v801 = vadd.f32 %v736, %v785
        %v802 = vadd.f32 %v737, %v786
        %v803 = vadd.f32 %v738, %v787
        %v804 = vadd.f32 %v739, %v788
        %v805 = vadd.f32 %v740, %v789
        %v806 = vadd.f32 %v741, %v790
        %v807 = vadd.f32 %v742, %v791
        %v808 = vadd.f32 %v743, %v792
        %v809 = vadd.f32 %v744, %v793
        %v810 = vadd.f32 %v745, %v794
        %v811 = vadd.f32 %v746, %v795
        %v812 = vadd.f32 %v747, %v796
        %v813 = vadd.f32 %v748, %v797
        %v814 = vadd.f32 %v749, %v798
        %v815 = vadd.f32 %v750, %v799
        %v816 = vadd.f32 %v751, %v800
        %v817 = vld [vmem:[%s247] sm:$0xff]
        %v818 = vld [vmem:[%s247 + $0x18] sm:$0xff]
        %v819 = vld [vmem:[#allocation2] sm:$0xff]
        %v820 = vld [vmem:[#allocation2 + $0x8] sm:$0xff]
        %821 = vmatpush.msra.mxu0 %v816
        %822 = vmatpush.msra.mxu0 %v815
        %823 = vmatpush.msra.mxu0 %v814
        %824 = vmatpush.msra.mxu0 %v813
        %825 = vmatpush.msra.mxu0 %v812
        %826 = vmatpush.msra.mxu0 %v811
        %827 = vmatpush.msra.mxu0 %v810
        %828 = vmatpush.msra.mxu0 %v809
        %829 = vmatpush.msra.mxu0 %v808
        %830 = vmatpush.msra.mxu0 %v807
        %831 = vmatpush.msra.mxu0 %v806
        %832 = vmatpush.msra.mxu0 %v805
        %833 = vmatpush.msra.mxu0 %v804
        %834 = vmatpush.msra.mxu0 %v803
        %835 = vmatpush.msra.mxu0 %v802
        %836 = vmatpush.msra.mxu0 %v801
        %837 = vmatmul.f32.gmra.mxu0 %v817
        %v838 = vpop.f32.mrf.mxu0
        %v839 = vadd.f32 0.0, %v838
        %840 = vmatmul.f32.gmra.mxu0 %v818
        %v841 = vpop.f32.mrf.mxu0
        %v842 = vadd.f32 0.0, %v841
        %843 = vdwg.mxu0
        %v844 = vadd.f32 %v819, %v839
        %v845 = vadd.f32 %v820, %v842
        %846 = vst [vmem:[#allocation2] sm:$0xff] %v844
        %847 = vst [vmem:[#allocation2 + $0x8] sm:$0xff] %v845
        %v848 = vstv 128
        %v849 = vsub.s32 %v291, %v848
        %v850 = vperm.slane %v849, 0
        %vm851 = vcmp.eq.s32.totalorder %v850, %v293
        %vm852 = vcmp.eq.s32.totalorder %v850, %v294
        %vm853 = vcmp.eq.s32.totalorder %v850, %v295
        %vm854 = vcmp.eq.s32.totalorder %v850, %v296
        %vm855 = vcmp.eq.s32.totalorder %v850, %v297
        %vm856 = vcmp.eq.s32.totalorder %v850, %v298
        %vm857 = vcmp.eq.s32.totalorder %v850, %v299
        %vm858 = vcmp.eq.s32.totalorder %v850, %v300
        %vm859 = vcmp.eq.s32.totalorder %v850, %v301
        %vm860 = vcmp.eq.s32.totalorder %v850, %v302
        %vm861 = vcmp.eq.s32.totalorder %v850, %v303
        %vm862 = vcmp.eq.s32.totalorder %v850, %v304
        %vm863 = vcmp.eq.s32.totalorder %v850, %v305
        %vm864 = vcmp.eq.s32.totalorder %v850, %v306
        %vm865 = vcmp.eq.s32.totalorder %v850, %v307
        %vm866 = vcmp.eq.s32.totalorder %v850, %v308
        %v867 = vsel %vm851, 1, 0
        %v868 = vsel %vm852, 1, 0
        %v869 = vsel %vm853, 1, 0
        %v870 = vsel %vm854, 1, 0
        %v871 = vsel %vm855, 1, 0
        %v872 = vsel %vm856, 1, 0
        %v873 = vsel %vm857, 1, 0
        %v874 = vsel %vm858, 1, 0
        %v875 = vsel %vm859, 1, 0
        %v876 = vsel %vm860, 1, 0
        %v877 = vsel %vm861, 1, 0
        %v878 = vsel %vm862, 1, 0
        %v879 = vsel %vm863, 1, 0
        %v880 = vsel %vm864, 1, 0
        %v881 = vsel %vm865, 1, 0
        %v882 = vsel %vm866, 1, 0
        %v883 = vcvt.s32.f32 %v867
        %v884 = vcvt.s32.f32 %v868
        %v885 = vcvt.s32.f32 %v869
        %v886 = vcvt.s32.f32 %v870
        %v887 = vcvt.s32.f32 %v871
        %v888 = vcvt.s32.f32 %v872
        %v889 = vcvt.s32.f32 %v873
        %v890 = vcvt.s32.f32 %v874
        %v891 = vcvt.s32.f32 %v875
        %v892 = vcvt.s32.f32 %v876
        %v893 = vcvt.s32.f32 %v877
        %v894 = vcvt.s32.f32 %v878
        %v895 = vcvt.s32.f32 %v879
        %v896 = vcvt.s32.f32 %v880
        %v897 = vcvt.s32.f32 %v881
        %v898 = vcvt.s32.f32 %v882
        %v899 = vperm.slane %v849, 1
        %vm900 = vcmp.eq.s32.totalorder %v899, %v293
        %vm901 = vcmp.eq.s32.totalorder %v899, %v294
        %vm902 = vcmp.eq.s32.totalorder %v899, %v295
        %vm903 = vcmp.eq.s32.totalorder %v899, %v296
        %vm904 = vcmp.eq.s32.totalorder %v899, %v297
        %vm905 = vcmp.eq.s32.totalorder %v899, %v298
        %vm906 = vcmp.eq.s32.totalorder %v899, %v299
        %vm907 = vcmp.eq.s32.totalorder %v899, %v300
        %vm908 = vcmp.eq.s32.totalorder %v899, %v301
        %vm909 = vcmp.eq.s32.totalorder %v899, %v302
        %vm910 = vcmp.eq.s32.totalorder %v899, %v303
        %vm911 = vcmp.eq.s32.totalorder %v899, %v304
        %vm912 = vcmp.eq.s32.totalorder %v899, %v305
        %vm913 = vcmp.eq.s32.totalorder %v899, %v306
        %vm914 = vcmp.eq.s32.totalorder %v899, %v307
        %vm915 = vcmp.eq.s32.totalorder %v899, %v308
        %v916 = vsel %vm900, 1, 0
        %v917 = vsel %vm901, 1, 0
        %v918 = vsel %vm902, 1, 0
        %v919 = vsel %vm903, 1, 0
        %v920 = vsel %vm904, 1, 0
        %v921 = vsel %vm905, 1, 0
        %v922 = vsel %vm906, 1, 0
        %v923 = vsel %vm907, 1, 0
        %v924 = vsel %vm908, 1, 0
        %v925 = vsel %vm909, 1, 0
        %v926 = vsel %vm910, 1, 0
        %v927 = vsel %vm911, 1, 0
        %v928 = vsel %vm912, 1, 0
        %v929 = vsel %vm913, 1, 0
        %v930 = vsel %vm914, 1, 0
        %v931 = vsel %vm915, 1, 0
        %v932 = vcvt.s32.f32 %v916
        %v933 = vcvt.s32.f32 %v917
        %v934 = vcvt.s32.f32 %v918
        %v935 = vcvt.s32.f32 %v919
        %v936 = vcvt.s32.f32 %v920
        %v937 = vcvt.s32.f32 %v921
        %v938 = vcvt.s32.f32 %v922
        %v939 = vcvt.s32.f32 %v923
        %v940 = vcvt.s32.f32 %v924
        %v941 = vcvt.s32.f32 %v925
        %v942 = vcvt.s32.f32 %v926
        %v943 = vcvt.s32.f32 %v927
        %v944 = vcvt.s32.f32 %v928
        %v945 = vcvt.s32.f32 %v929
        %v946 = vcvt.s32.f32 %v930
        %v947 = vcvt.s32.f32 %v931
        %v948 = vadd.f32 %v883, %v932
        %v949 = vadd.f32 %v884, %v933
        %v950 = vadd.f32 %v885, %v934
        %v951 = vadd.f32 %v886, %v935
        %v952 = vadd.f32 %v887, %v936
        %v953 = vadd.f32 %v888, %v937
        %v954 = vadd.f32 %v889, %v938
        %v955 = vadd.f32 %v890, %v939
        %v956 = vadd.f32 %v891, %v940
        %v957 = vadd.f32 %v892, %v941
        %v958 = vadd.f32 %v893, %v942
        %v959 = vadd.f32 %v894, %v943
        %v960 = vadd.f32 %v895, %v944
        %v961 = vadd.f32 %v896, %v945
        %v962 = vadd.f32 %v897, %v946
        %v963 = vadd.f32 %v898, %v947
        %v964 = vperm.slane %v849, 2
        %vm965 = vcmp.eq.s32.totalorder %v964, %v293
        %vm966 = vcmp.eq.s32.totalorder %v964, %v294
        %vm967 = vcmp.eq.s32.totalorder %v964, %v295
        %vm968 = vcmp.eq.s32.totalorder %v964, %v296
        %vm969 = vcmp.eq.s32.totalorder %v964, %v297
        %vm970 = vcmp.eq.s32.totalorder %v964, %v298
        %vm971 = vcmp.eq.s32.totalorder %v964, %v299
        %vm972 = vcmp.eq.s32.totalorder %v964, %v300
        %vm973 = vcmp.eq.s32.totalorder %v964, %v301
        %vm974 = vcmp.eq.s32.totalorder %v964, %v302
        %vm975 = vcmp.eq.s32.totalorder %v964, %v303
        %vm976 = vcmp.eq.s32.totalorder %v964, %v304
        %vm977 = vcmp.eq.s32.totalorder %v964, %v305
        %vm978 = vcmp.eq.s32.totalorder %v964, %v306
        %vm979 = vcmp.eq.s32.totalorder %v964, %v307
        %vm980 = vcmp.eq.s32.totalorder %v964, %v308
        %v981 = vsel %vm965, 1, 0
        %v982 = vsel %vm966, 1, 0
        %v983 = vsel %vm967, 1, 0
        %v984 = vsel %vm968, 1, 0
        %v985 = vsel %vm969, 1, 0
        %v986 = vsel %vm970, 1, 0
        %v987 = vsel %vm971, 1, 0
        %v988 = vsel %vm972, 1, 0
        %v989 = vsel %vm973, 1, 0
        %v990 = vsel %vm974, 1, 0
        %v991 = vsel %vm975, 1, 0
        %v992 = vsel %vm976, 1, 0
        %v993 = vsel %vm977, 1, 0
        %v994 = vsel %vm978, 1, 0
        %v995 = vsel %vm979, 1, 0
        %v996 = vsel %vm980, 1, 0
        %v997 = vcvt.s32.f32 %v981
        %v998 = vcvt.s32.f32 %v982
        %v999 = vcvt.s32.f32 %v983
        %v1000 = vcvt.s32.f32 %v984
        %v1001 = vcvt.s32.f32 %v985
        %v1002 = vcvt.s32.f32 %v986
        %v1003 = vcvt.s32.f32 %v987
        %v1004 = vcvt.s32.f32 %v988
        %v1005 = vcvt.s32.f32 %v989
        %v1006 = vcvt.s32.f32 %v990
        %v1007 = vcvt.s32.f32 %v991
        %v1008 = vcvt.s32.f32 %v992
        %v1009 = vcvt.s32.f32 %v993
        %v1010 = vcvt.s32.f32 %v994
        %v1011 = vcvt.s32.f32 %v995
        %v1012 = vcvt.s32.f32 %v996
        %v1013 = vadd.f32 %v948, %v997
        %v1014 = vadd.f32 %v949, %v998
        %v1015 = vadd.f32 %v950, %v999
        %v1016 = vadd.f32 %v951, %v1000
        %v1017 = vadd.f32 %v952, %v1001
        %v1018 = vadd.f32 %v953, %v1002
        %v1019 = vadd.f32 %v954, %v1003
        %v1020 = vadd.f32 %v955, %v1004
        %v1021 = vadd.f32 %v956, %v1005
        %v1022 = vadd.f32 %v957, %v1006
        %v1023 = vadd.f32 %v958, %v1007
        %v1024 = vadd.f32 %v959, %v1008
        %v1025 = vadd.f32 %v960, %v1009
        %v1026 = vadd.f32 %v961, %v1010
        %v1027 = vadd.f32 %v962, %v1011
        %v1028 = vadd.f32 %v963, %v1012
        %v1029 = vperm.slane %v849, 3
        %vm1030 = vcmp.eq.s32.totalorder %v1029, %v293
        %vm1031 = vcmp.eq.s32.totalorder %v1029, %v294
        %vm1032 = vcmp.eq.s32.totalorder %v1029, %v295
        %vm1033 = vcmp.eq.s32.totalorder %v1029, %v296
        %vm1034 = vcmp.eq.s32.totalorder %v1029, %v297
        %vm1035 = vcmp.eq.s32.totalorder %v1029, %v298
        %vm1036 = vcmp.eq.s32.totalorder %v1029, %v299
        %vm1037 = vcmp.eq.s32.totalorder %v1029, %v300
        %vm1038 = vcmp.eq.s32.totalorder %v1029, %v301
        %vm1039 = vcmp.eq.s32.totalorder %v1029, %v302
        %vm1040 = vcmp.eq.s32.totalorder %v1029, %v303
        %vm1041 = vcmp.eq.s32.totalorder %v1029, %v304
        %vm1042 = vcmp.eq.s32.totalorder %v1029, %v305
        %vm1043 = vcmp.eq.s32.totalorder %v1029, %v306
        %vm1044 = vcmp.eq.s32.totalorder %v1029, %v307
        %vm1045 = vcmp.eq.s32.totalorder %v1029, %v308
        %v1046 = vsel %vm1030, 1, 0
        %v1047 = vsel %vm1031, 1, 0
        %v1048 = vsel %vm1032, 1, 0
        %v1049 = vsel %vm1033, 1, 0
        %v1050 = vsel %vm1034, 1, 0
        %v1051 = vsel %vm1035, 1, 0
        %v1052 = vsel %vm1036, 1, 0
        %v1053 = vsel %vm1037, 1, 0
        %v1054 = vsel %vm1038, 1, 0
        %v1055 = vsel %vm1039, 1, 0
        %v1056 = vsel %vm1040, 1, 0
        %v1057 = vsel %vm1041, 1, 0
        %v1058 = vsel %vm1042, 1, 0
        %v1059 = vsel %vm1043, 1, 0
        %v1060 = vsel %vm1044, 1, 0
        %v1061 = vsel %vm1045, 1, 0
        %v1062 = vcvt.s32.f32 %v1046
        %v1063 = vcvt.s32.f32 %v1047
        %v1064 = vcvt.s32.f32 %v1048
        %v1065 = vcvt.s32.f32 %v1049
        %v1066 = vcvt.s32.f32 %v1050
        %v1067 = vcvt.s32.f32 %v1051
        %v1068 = vcvt.s32.f32 %v1052
        %v1069 = vcvt.s32.f32 %v1053
        %v1070 = vcvt.s32.f32 %v1054
        %v1071 = vcvt.s32.f32 %v1055
        %v1072 = vcvt.s32.f32 %v1056
        %v1073 = vcvt.s32.f32 %v1057
        %v1074 = vcvt.s32.f32 %v1058
        %v1075 = vcvt.s32.f32 %v1059
        %v1076 = vcvt.s32.f32 %v1060
        %v1077 = vcvt.s32.f32 %v1061
        %v1078 = vadd.f32 %v1013, %v1062
        %v1079 = vadd.f32 %v1014, %v1063
        %v1080 = vadd.f32 %v1015, %v1064
        %v1081 = vadd.f32 %v1016, %v1065
        %v1082 = vadd.f32 %v1017, %v1066
        %v1083 = vadd.f32 %v1018, %v1067
        %v1084 = vadd.f32 %v1019, %v1068
        %v1085 = vadd.f32 %v1020, %v1069
        %v1086 = vadd.f32 %v1021, %v1070
        %v1087 = vadd.f32 %v1022, %v1071
        %v1088 = vadd.f32 %v1023, %v1072
        %v1089 = vadd.f32 %v1024, %v1073
        %v1090 = vadd.f32 %v1025, %v1074
        %v1091 = vadd.f32 %v1026, %v1075
        %v1092 = vadd.f32 %v1027, %v1076
        %v1093 = vadd.f32 %v1028, %v1077
        %v1094 = vperm.slane %v849, 4
        %vm1095 = vcmp.eq.s32.totalorder %v1094, %v293
        %vm1096 = vcmp.eq.s32.totalorder %v1094, %v294
        %vm1097 = vcmp.eq.s32.totalorder %v1094, %v295
        %vm1098 = vcmp.eq.s32.totalorder %v1094, %v296
        %vm1099 = vcmp.eq.s32.totalorder %v1094, %v297
        %vm1100 = vcmp.eq.s32.totalorder %v1094, %v298
        %vm1101 = vcmp.eq.s32.totalorder %v1094, %v299
        %vm1102 = vcmp.eq.s32.totalorder %v1094, %v300
        %vm1103 = vcmp.eq.s32.totalorder %v1094, %v301
        %vm1104 = vcmp.eq.s32.totalorder %v1094, %v302
        %vm1105 = vcmp.eq.s32.totalorder %v1094, %v303
        %vm1106 = vcmp.eq.s32.totalorder %v1094, %v304
        %vm1107 = vcmp.eq.s32.totalorder %v1094, %v305
        %vm1108 = vcmp.eq.s32.totalorder %v1094, %v306
        %vm1109 = vcmp.eq.s32.totalorder %v1094, %v307
        %vm1110 = vcmp.eq.s32.totalorder %v1094, %v308
        %v1111 = vsel %vm1095, 1, 0
        %v1112 = vsel %vm1096, 1, 0
        %v1113 = vsel %vm1097, 1, 0
        %v1114 = vsel %vm1098, 1, 0
        %v1115 = vsel %vm1099, 1, 0
        %v1116 = vsel %vm1100, 1, 0
        %v1117 = vsel %vm1101, 1, 0
        %v1118 = vsel %vm1102, 1, 0
        %v1119 = vsel %vm1103, 1, 0
        %v1120 = vsel %vm1104, 1, 0
        %v1121 = vsel %vm1105, 1, 0
        %v1122 = vsel %vm1106, 1, 0
        %v1123 = vsel %vm1107, 1, 0
        %v1124 = vsel %vm1108, 1, 0
        %v1125 = vsel %vm1109, 1, 0
        %v1126 = vsel %vm1110, 1, 0
        %v1127 = vcvt.s32.f32 %v1111
        %v1128 = vcvt.s32.f32 %v1112
        %v1129 = vcvt.s32.f32 %v1113
        %v1130 = vcvt.s32.f32 %v1114
        %v1131 = vcvt.s32.f32 %v1115
        %v1132 = vcvt.s32.f32 %v1116
        %v1133 = vcvt.s32.f32 %v1117
        %v1134 = vcvt.s32.f32 %v1118
        %v1135 = vcvt.s32.f32 %v1119
        %v1136 = vcvt.s32.f32 %v1120
        %v1137 = vcvt.s32.f32 %v1121
        %v1138 = vcvt.s32.f32 %v1122
        %v1139 = vcvt.s32.f32 %v1123
        %v1140 = vcvt.s32.f32 %v1124
        %v1141 = vcvt.s32.f32 %v1125
        %v1142 = vcvt.s32.f32 %v1126
        %v1143 = vadd.f32 %v1078, %v1127
        %v1144 = vadd.f32 %v1079, %v1128
        %v1145 = vadd.f32 %v1080, %v1129
        %v1146 = vadd.f32 %v1081, %v1130
        %v1147 = vadd.f32 %v1082, %v1131
        %v1148 = vadd.f32 %v1083, %v1132
        %v1149 = vadd.f32 %v1084, %v1133
        %v1150 = vadd.f32 %v1085, %v1134
        %v1151 = vadd.f32 %v1086, %v1135
        %v1152 = vadd.f32 %v1087, %v1136
        %v1153 = vadd.f32 %v1088, %v1137
        %v1154 = vadd.f32 %v1089, %v1138
        %v1155 = vadd.f32 %v1090, %v1139
        %v1156 = vadd.f32 %v1091, %v1140
        %v1157 = vadd.f32 %v1092, %v1141
        %v1158 = vadd.f32 %v1093, %v1142
        %v1159 = vperm.slane %v849, 5
        %vm1160 = vcmp.eq.s32.totalorder %v1159, %v293
        %vm1161 = vcmp.eq.s32.totalorder %v1159, %v294
        %vm1162 = vcmp.eq.s32.totalorder %v1159, %v295
        %vm1163 = vcmp.eq.s32.totalorder %v1159, %v296
        %vm1164 = vcmp.eq.s32.totalorder %v1159, %v297
        %vm1165 = vcmp.eq.s32.totalorder %v1159, %v298
        %vm1166 = vcmp.eq.s32.totalorder %v1159, %v299
        %vm1167 = vcmp.eq.s32.totalorder %v1159, %v300
        %vm1168 = vcmp.eq.s32.totalorder %v1159, %v301
        %vm1169 = vcmp.eq.s32.totalorder %v1159, %v302
        %vm1170 = vcmp.eq.s32.totalorder %v1159, %v303
        %vm1171 = vcmp.eq.s32.totalorder %v1159, %v304
        %vm1172 = vcmp.eq.s32.totalorder %v1159, %v305
        %vm1173 = vcmp.eq.s32.totalorder %v1159, %v306
        %vm1174 = vcmp.eq.s32.totalorder %v1159, %v307
        %vm1175 = vcmp.eq.s32.totalorder %v1159, %v308
        %v1176 = vsel %vm1160, 1, 0
        %v1177 = vsel %vm1161, 1, 0
        %v1178 = vsel %vm1162, 1, 0
        %v1179 = vsel %vm1163, 1, 0
        %v1180 = vsel %vm1164, 1, 0
        %v1181 = vsel %vm1165, 1, 0
        %v1182 = vsel %vm1166, 1, 0
        %v1183 = vsel %vm1167, 1, 0
        %v1184 = vsel %vm1168, 1, 0
        %v1185 = vsel %vm1169, 1, 0
        %v1186 = vsel %vm1170, 1, 0
        %v1187 = vsel %vm1171, 1, 0
        %v1188 = vsel %vm1172, 1, 0
        %v1189 = vsel %vm1173, 1, 0
        %v1190 = vsel %vm1174, 1, 0
        %v1191 = vsel %vm1175, 1, 0
        %v1192 = vcvt.s32.f32 %v1176
        %v1193 = vcvt.s32.f32 %v1177
        %v1194 = vcvt.s32.f32 %v1178
        %v1195 = vcvt.s32.f32 %v1179
        %v1196 = vcvt.s32.f32 %v1180
        %v1197 = vcvt.s32.f32 %v1181
        %v1198 = vcvt.s32.f32 %v1182
        %v1199 = vcvt.s32.f32 %v1183
        %v1200 = vcvt.s32.f32 %v1184
        %v1201 = vcvt.s32.f32 %v1185
        %v1202 = vcvt.s32.f32 %v1186
        %v1203 = vcvt.s32.f32 %v1187
        %v1204 = vcvt.s32.f32 %v1188
        %v1205 = vcvt.s32.f32 %v1189
        %v1206 = vcvt.s32.f32 %v1190
        %v1207 = vcvt.s32.f32 %v1191
        %v1208 = vadd.f32 %v1143, %v1192
        %v1209 = vadd.f32 %v1144, %v1193
        %v1210 = vadd.f32 %v1145, %v1194
        %v1211 = vadd.f32 %v1146, %v1195
        %v1212 = vadd.f32 %v1147, %v1196
        %v1213 = vadd.f32 %v1148, %v1197
        %v1214 = vadd.f32 %v1149, %v1198
        %v1215 = vadd.f32 %v1150, %v1199
        %v1216 = vadd.f32 %v1151, %v1200
        %v1217 = vadd.f32 %v1152, %v1201
        %v1218 = vadd.f32 %v1153, %v1202
        %v1219 = vadd.f32 %v1154, %v1203
        %v1220 = vadd.f32 %v1155, %v1204
        %v1221 = vadd.f32 %v1156, %v1205
        %v1222 = vadd.f32 %v1157, %v1206
        %v1223 = vadd.f32 %v1158, %v1207
        %v1224 = vperm.slane %v849, 6
        %vm1225 = vcmp.eq.s32.totalorder %v1224, %v293
        %vm1226 = vcmp.eq.s32.totalorder %v1224, %v294
        %vm1227 = vcmp.eq.s32.totalorder %v1224, %v295
        %vm1228 = vcmp.eq.s32.totalorder %v1224, %v296
        %vm1229 = vcmp.eq.s32.totalorder %v1224, %v297
        %vm1230 = vcmp.eq.s32.totalorder %v1224, %v298
        %vm1231 = vcmp.eq.s32.totalorder %v1224, %v299
        %vm1232 = vcmp.eq.s32.totalorder %v1224, %v300
        %vm1233 = vcmp.eq.s32.totalorder %v1224, %v301
        %vm1234 = vcmp.eq.s32.totalorder %v1224, %v302
        %vm1235 = vcmp.eq.s32.totalorder %v1224, %v303
        %vm1236 = vcmp.eq.s32.totalorder %v1224, %v304
        %vm1237 = vcmp.eq.s32.totalorder %v1224, %v305
        %vm1238 = vcmp.eq.s32.totalorder %v1224, %v306
        %vm1239 = vcmp.eq.s32.totalorder %v1224, %v307
        %vm1240 = vcmp.eq.s32.totalorder %v1224, %v308
        %v1241 = vsel %vm1225, 1, 0
        %v1242 = vsel %vm1226, 1, 0
        %v1243 = vsel %vm1227, 1, 0
        %v1244 = vsel %vm1228, 1, 0
        %v1245 = vsel %vm1229, 1, 0
        %v1246 = vsel %vm1230, 1, 0
        %v1247 = vsel %vm1231, 1, 0
        %v1248 = vsel %vm1232, 1, 0
        %v1249 = vsel %vm1233, 1, 0
        %v1250 = vsel %vm1234, 1, 0
        %v1251 = vsel %vm1235, 1, 0
        %v1252 = vsel %vm1236, 1, 0
        %v1253 = vsel %vm1237, 1, 0
        %v1254 = vsel %vm1238, 1, 0
        %v1255 = vsel %vm1239, 1, 0
        %v1256 = vsel %vm1240, 1, 0
        %v1257 = vcvt.s32.f32 %v1241
        %v1258 = vcvt.s32.f32 %v1242
        %v1259 = vcvt.s32.f32 %v1243
        %v1260 = vcvt.s32.f32 %v1244
        %v1261 = vcvt.s32.f32 %v1245
        %v1262 = vcvt.s32.f32 %v1246
        %v1263 = vcvt.s32.f32 %v1247
        %v1264 = vcvt.s32.f32 %v1248
        %v1265 = vcvt.s32.f32 %v1249
        %v1266 = vcvt.s32.f32 %v1250
        %v1267 = vcvt.s32.f32 %v1251
        %v1268 = vcvt.s32.f32 %v1252
        %v1269 = vcvt.s32.f32 %v1253
        %v1270 = vcvt.s32.f32 %v1254
        %v1271 = vcvt.s32.f32 %v1255
        %v1272 = vcvt.s32.f32 %v1256
        %v1273 = vadd.f32 %v1208, %v1257
        %v1274 = vadd.f32 %v1209, %v1258
        %v1275 = vadd.f32 %v1210, %v1259
        %v1276 = vadd.f32 %v1211, %v1260
        %v1277 = vadd.f32 %v1212, %v1261
        %v1278 = vadd.f32 %v1213, %v1262
        %v1279 = vadd.f32 %v1214, %v1263
        %v1280 = vadd.f32 %v1215, %v1264
        %v1281 = vadd.f32 %v1216, %v1265
        %v1282 = vadd.f32 %v1217, %v1266
        %v1283 = vadd.f32 %v1218, %v1267
        %v1284 = vadd.f32 %v1219, %v1268
        %v1285 = vadd.f32 %v1220, %v1269
        %v1286 = vadd.f32 %v1221, %v1270
        %v1287 = vadd.f32 %v1222, %v1271
        %v1288 = vadd.f32 %v1223, %v1272
        %v1289 = vperm.slane %v849, 7
        %vm1290 = vcmp.eq.s32.totalorder %v1289, %v293
        %vm1291 = vcmp.eq.s32.totalorder %v1289, %v294
        %vm1292 = vcmp.eq.s32.totalorder %v1289, %v295
        %vm1293 = vcmp.eq.s32.totalorder %v1289, %v296
        %vm1294 = vcmp.eq.s32.totalorder %v1289, %v297
        %vm1295 = vcmp.eq.s32.totalorder %v1289, %v298
        %vm1296 = vcmp.eq.s32.totalorder %v1289, %v299
        %vm1297 = vcmp.eq.s32.totalorder %v1289, %v300
        %vm1298 = vcmp.eq.s32.totalorder %v1289, %v301
        %vm1299 = vcmp.eq.s32.totalorder %v1289, %v302
        %vm1300 = vcmp.eq.s32.totalorder %v1289, %v303
        %vm1301 = vcmp.eq.s32.totalorder %v1289, %v304
        %vm1302 = vcmp.eq.s32.totalorder %v1289, %v305
        %vm1303 = vcmp.eq.s32.totalorder %v1289, %v306
        %vm1304 = vcmp.eq.s32.totalorder %v1289, %v307
        %vm1305 = vcmp.eq.s32.totalorder %v1289, %v308
        %v1306 = vsel %vm1290, 1, 0
        %v1307 = vsel %vm1291, 1, 0
        %v1308 = vsel %vm1292, 1, 0
        %v1309 = vsel %vm1293, 1, 0
        %v1310 = vsel %vm1294, 1, 0
        %v1311 = vsel %vm1295, 1, 0
        %v1312 = vsel %vm1296, 1, 0
        %v1313 = vsel %vm1297, 1, 0
        %v1314 = vsel %vm1298, 1, 0
        %v1315 = vsel %vm1299, 1, 0
        %v1316 = vsel %vm1300, 1, 0
        %v1317 = vsel %vm1301, 1, 0
        %v1318 = vsel %vm1302, 1, 0
        %v1319 = vsel %vm1303, 1, 0
        %v1320 = vsel %vm1304, 1, 0
        %v1321 = vsel %vm1305, 1, 0
        %v1322 = vcvt.s32.f32 %v1306
        %v1323 = vcvt.s32.f32 %v1307
        %v1324 = vcvt.s32.f32 %v1308
        %v1325 = vcvt.s32.f32 %v1309
        %v1326 = vcvt.s32.f32 %v1310
        %v1327 = vcvt.s32.f32 %v1311
        %v1328 = vcvt.s32.f32 %v1312
        %v1329 = vcvt.s32.f32 %v1313
        %v1330 = vcvt.s32.f32 %v1314
        %v1331 = vcvt.s32.f32 %v1315
        %v1332 = vcvt.s32.f32 %v1316
        %v1333 = vcvt.s32.f32 %v1317
        %v1334 = vcvt.s32.f32 %v1318
        %v1335 = vcvt.s32.f32 %v1319
        %v1336 = vcvt.s32.f32 %v1320
        %v1337 = vcvt.s32.f32 %v1321
        %v1338 = vadd.f32 %v1273, %v1322
        %v1339 = vadd.f32 %v1274, %v1323
        %v1340 = vadd.f32 %v1275, %v1324
        %v1341 = vadd.f32 %v1276, %v1325
        %v1342 = vadd.f32 %v1277, %v1326
        %v1343 = vadd.f32 %v1278, %v1327
        %v1344 = vadd.f32 %v1279, %v1328
        %v1345 = vadd.f32 %v1280, %v1329
        %v1346 = vadd.f32 %v1281, %v1330
        %v1347 = vadd.f32 %v1282, %v1331
        %v1348 = vadd.f32 %v1283, %v1332
        %v1349 = vadd.f32 %v1284, %v1333
        %v1350 = vadd.f32 %v1285, %v1334
        %v1351 = vadd.f32 %v1286, %v1335
        %v1352 = vadd.f32 %v1287, %v1336
        %v1353 = vadd.f32 %v1288, %v1337
        %s1354 = scalar_lea.vmem %s247, 8 [#allocation4]
        %v1355 = vld [vmem:[%s1354] sm:$0xff]
        %v1356 = vld [vmem:[%s1354 + $0x18] sm:$0xff]
        %v1357 = vld [vmem:[#allocation2] sm:$0xff]
        %v1358 = vld [vmem:[#allocation2 + $0x8] sm:$0xff]
        %1359 = vmatpush.msra.mxu0 %v1353
        %1360 = vmatpush.msra.mxu0 %v1352
        %1361 = vmatpush.msra.mxu0 %v1351
        %1362 = vmatpush.msra.mxu0 %v1350
        %1363 = vmatpush.msra.mxu0 %v1349
        %1364 = vmatpush.msra.mxu0 %v1348
        %1365 = vmatpush.msra.mxu0 %v1347
        %1366 = vmatpush.msra.mxu0 %v1346
        %1367 = vmatpush.msra.mxu0 %v1345
        %1368 = vmatpush.msra.mxu0 %v1344
        %1369 = vmatpush.msra.mxu0 %v1343
        %1370 = vmatpush.msra.mxu0 %v1342
        %1371 = vmatpush.msra.mxu0 %v1341
        %1372 = vmatpush.msra.mxu0 %v1340
        %1373 = vmatpush.msra.mxu0 %v1339
        %1374 = vmatpush.msra.mxu0 %v1338
        %1375 = vmatmul.f32.gmra.mxu0 %v1355
        %v1376 = vpop.f32.mrf.mxu0
        %v1377 = vadd.f32 0.0, %v1376
        %1378 = vmatmul.f32.gmra.mxu0 %v1356
        %v1379 = vpop.f32.mrf.mxu0
        %v1380 = vadd.f32 0.0, %v1379
        %1381 = vdwg.mxu0
        %v1382 = vadd.f32 %v1357, %v1377
        %v1383 = vadd.f32 %v1358, %v1380
        %1384 = vst [vmem:[#allocation2] sm:$0xff] %v1382
        %1385 = vst [vmem:[#allocation2 + $0x8] sm:$0xff] %v1383
        %v1386 = vstv 256
        %v1387 = vsub.s32 %v291, %v1386
        %v1388 = vperm.slane %v1387, 0
        %vm1389 = vcmp.eq.s32.totalorder %v1388, %v293
        %vm1390 = vcmp.eq.s32.totalorder %v1388, %v294
        %vm1391 = vcmp.eq.s32.totalorder %v1388, %v295
        %vm1392 = vcmp.eq.s32.totalorder %v1388, %v296
        %vm1393 = vcmp.eq.s32.totalorder %v1388, %v297
        %vm1394 = vcmp.eq.s32.totalorder %v1388, %v298
        %vm1395 = vcmp.eq.s32.totalorder %v1388, %v299
        %vm1396 = vcmp.eq.s32.totalorder %v1388, %v300
        %vm1397 = vcmp.eq.s32.totalorder %v1388, %v301
        %vm1398 = vcmp.eq.s32.totalorder %v1388, %v302
        %vm1399 = vcmp.eq.s32.totalorder %v1388, %v303
        %vm1400 = vcmp.eq.s32.totalorder %v1388, %v304
        %vm1401 = vcmp.eq.s32.totalorder %v1388, %v305
        %vm1402 = vcmp.eq.s32.totalorder %v1388, %v306
        %vm1403 = vcmp.eq.s32.totalorder %v1388, %v307
        %vm1404 = vcmp.eq.s32.totalorder %v1388, %v308
        %v1405 = vsel %vm1389, 1, 0
        %v1406 = vsel %vm1390, 1, 0
        %v1407 = vsel %vm1391, 1, 0
        %v1408 = vsel %vm1392, 1, 0
        %v1409 = vsel %vm1393, 1, 0
        %v1410 = vsel %vm1394, 1, 0
        %v1411 = vsel %vm1395, 1, 0
        %v1412 = vsel %vm1396, 1, 0
        %v1413 = vsel %vm1397, 1, 0
        %v1414 = vsel %vm1398, 1, 0
        %v1415 = vsel %vm1399, 1, 0
        %v1416 = vsel %vm1400, 1, 0
        %v1417 = vsel %vm1401, 1, 0
        %v1418 = vsel %vm1402, 1, 0
        %v1419 = vsel %vm1403, 1, 0
        %v1420 = vsel %vm1404, 1, 0
        %v1421 = vcvt.s32.f32 %v1405
        %v1422 = vcvt.s32.f32 %v1406
        %v1423 = vcvt.s32.f32 %v1407
        %v1424 = vcvt.s32.f32 %v1408
        %v1425 = vcvt.s32.f32 %v1409
        %v1426 = vcvt.s32.f32 %v1410
        %v1427 = vcvt.s32.f32 %v1411
        %v1428 = vcvt.s32.f32 %v1412
        %v1429 = vcvt.s32.f32 %v1413
        %v1430 = vcvt.s32.f32 %v1414
        %v1431 = vcvt.s32.f32 %v1415
        %v1432 = vcvt.s32.f32 %v1416
        %v1433 = vcvt.s32.f32 %v1417
        %v1434 = vcvt.s32.f32 %v1418
        %v1435 = vcvt.s32.f32 %v1419
        %v1436 = vcvt.s32.f32 %v1420
        %v1437 = vperm.slane %v1387, 1
        %vm1438 = vcmp.eq.s32.totalorder %v1437, %v293
        %vm1439 = vcmp.eq.s32.totalorder %v1437, %v294
        %vm1440 = vcmp.eq.s32.totalorder %v1437, %v295
        %vm1441 = vcmp.eq.s32.totalorder %v1437, %v296
        %vm1442 = vcmp.eq.s32.totalorder %v1437, %v297
        %vm1443 = vcmp.eq.s32.totalorder %v1437, %v298
        %vm1444 = vcmp.eq.s32.totalorder %v1437, %v299
        %vm1445 = vcmp.eq.s32.totalorder %v1437, %v300
        %vm1446 = vcmp.eq.s32.totalorder %v1437, %v301
        %vm1447 = vcmp.eq.s32.totalorder %v1437, %v302
        %vm1448 = vcmp.eq.s32.totalorder %v1437, %v303
        %vm1449 = vcmp.eq.s32.totalorder %v1437, %v304
        %vm1450 = vcmp.eq.s32.totalorder %v1437, %v305
        %vm1451 = vcmp.eq.s32.totalorder %v1437, %v306
        %vm1452 = vcmp.eq.s32.totalorder %v1437, %v307
        %vm1453 = vcmp.eq.s32.totalorder %v1437, %v308
        %v1454 = vsel %vm1438, 1, 0
        %v1455 = vsel %vm1439, 1, 0
        %v1456 = vsel %vm1440, 1, 0
        %v1457 = vsel %vm1441, 1, 0
        %v1458 = vsel %vm1442, 1, 0
        %v1459 = vsel %vm1443, 1, 0
        %v1460 = vsel %vm1444, 1, 0
        %v1461 = vsel %vm1445, 1, 0
        %v1462 = vsel %vm1446, 1, 0
        %v1463 = vsel %vm1447, 1, 0
        %v1464 = vsel %vm1448, 1, 0
        %v1465 = vsel %vm1449, 1, 0
        %v1466 = vsel %vm1450, 1, 0
        %v1467 = vsel %vm1451, 1, 0
        %v1468 = vsel %vm1452, 1, 0
        %v1469 = vsel %vm1453, 1, 0
        %v1470 = vcvt.s32.f32 %v1454
        %v1471 = vcvt.s32.f32 %v1455
        %v1472 = vcvt.s32.f32 %v1456
        %v1473 = vcvt.s32.f32 %v1457
        %v1474 = vcvt.s32.f32 %v1458
        %v1475 = vcvt.s32.f32 %v1459
        %v1476 = vcvt.s32.f32 %v1460
        %v1477 = vcvt.s32.f32 %v1461
        %v1478 = vcvt.s32.f32 %v1462
        %v1479 = vcvt.s32.f32 %v1463
        %v1480 = vcvt.s32.f32 %v1464
        %v1481 = vcvt.s32.f32 %v1465
        %v1482 = vcvt.s32.f32 %v1466
        %v1483 = vcvt.s32.f32 %v1467
        %v1484 = vcvt.s32.f32 %v1468
        %v1485 = vcvt.s32.f32 %v1469
        %v1486 = vadd.f32 %v1421, %v1470
        %v1487 = vadd.f32 %v1422, %v1471
        %v1488 = vadd.f32 %v1423, %v1472
        %v1489 = vadd.f32 %v1424, %v1473
        %v1490 = vadd.f32 %v1425, %v1474
        %v1491 = vadd.f32 %v1426, %v1475
        %v1492 = vadd.f32 %v1427, %v1476
        %v1493 = vadd.f32 %v1428, %v1477
        %v1494 = vadd.f32 %v1429, %v1478
        %v1495 = vadd.f32 %v1430, %v1479
        %v1496 = vadd.f32 %v1431, %v1480
        %v1497 = vadd.f32 %v1432, %v1481
        %v1498 = vadd.f32 %v1433, %v1482
        %v1499 = vadd.f32 %v1434, %v1483
        %v1500 = vadd.f32 %v1435, %v1484
        %v1501 = vadd.f32 %v1436, %v1485
        %v1502 = vperm.slane %v1387, 2
        %vm1503 = vcmp.eq.s32.totalorder %v1502, %v293
        %vm1504 = vcmp.eq.s32.totalorder %v1502, %v294
        %vm1505 = vcmp.eq.s32.totalorder %v1502, %v295
        %vm1506 = vcmp.eq.s32.totalorder %v1502, %v296
        %vm1507 = vcmp.eq.s32.totalorder %v1502, %v297
        %vm1508 = vcmp.eq.s32.totalorder %v1502, %v298
        %vm1509 = vcmp.eq.s32.totalorder %v1502, %v299
        %vm1510 = vcmp.eq.s32.totalorder %v1502, %v300
        %vm1511 = vcmp.eq.s32.totalorder %v1502, %v301
        %vm1512 = vcmp.eq.s32.totalorder %v1502, %v302
        %vm1513 = vcmp.eq.s32.totalorder %v1502, %v303
        %vm1514 = vcmp.eq.s32.totalorder %v1502, %v304
        %vm1515 = vcmp.eq.s32.totalorder %v1502, %v305
        %vm1516 = vcmp.eq.s32.totalorder %v1502, %v306
        %vm1517 = vcmp.eq.s32.totalorder %v1502, %v307
        %vm1518 = vcmp.eq.s32.totalorder %v1502, %v308
        %v1519 = vsel %vm1503, 1, 0
        %v1520 = vsel %vm1504, 1, 0
        %v1521 = vsel %vm1505, 1, 0
        %v1522 = vsel %vm1506, 1, 0
        %v1523 = vsel %vm1507, 1, 0
        %v1524 = vsel %vm1508, 1, 0
        %v1525 = vsel %vm1509, 1, 0
        %v1526 = vsel %vm1510, 1, 0
        %v1527 = vsel %vm1511, 1, 0
        %v1528 = vsel %vm1512, 1, 0
        %v1529 = vsel %vm1513, 1, 0
        %v1530 = vsel %vm1514, 1, 0
        %v1531 = vsel %vm1515, 1, 0
        %v1532 = vsel %vm1516, 1, 0
        %v1533 = vsel %vm1517, 1, 0
        %v1534 = vsel %vm1518, 1, 0
        %v1535 = vcvt.s32.f32 %v1519
        %v1536 = vcvt.s32.f32 %v1520
        %v1537 = vcvt.s32.f32 %v1521
        %v1538 = vcvt.s32.f32 %v1522
        %v1539 = vcvt.s32.f32 %v1523
        %v1540 = vcvt.s32.f32 %v1524
        %v1541 = vcvt.s32.f32 %v1525
        %v1542 = vcvt.s32.f32 %v1526
        %v1543 = vcvt.s32.f32 %v1527
        %v1544 = vcvt.s32.f32 %v1528
        %v1545 = vcvt.s32.f32 %v1529
        %v1546 = vcvt.s32.f32 %v1530
        %v1547 = vcvt.s32.f32 %v1531
        %v1548 = vcvt.s32.f32 %v1532
        %v1549 = vcvt.s32.f32 %v1533
        %v1550 = vcvt.s32.f32 %v1534
        %v1551 = vadd.f32 %v1486, %v1535
        %v1552 = vadd.f32 %v1487, %v1536
        %v1553 = vadd.f32 %v1488, %v1537
        %v1554 = vadd.f32 %v1489, %v1538
        %v1555 = vadd.f32 %v1490, %v1539
        %v1556 = vadd.f32 %v1491, %v1540
        %v1557 = vadd.f32 %v1492, %v1541
        %v1558 = vadd.f32 %v1493, %v1542
        %v1559 = vadd.f32 %v1494, %v1543
        %v1560 = vadd.f32 %v1495, %v1544
        %v1561 = vadd.f32 %v1496, %v1545
        %v1562 = vadd.f32 %v1497, %v1546
        %v1563 = vadd.f32 %v1498, %v1547
        %v1564 = vadd.f32 %v1499, %v1548
        %v1565 = vadd.f32 %v1500, %v1549
        %v1566 = vadd.f32 %v1501, %v1550
        %v1567 = vperm.slane %v1387, 3
        %vm1568 = vcmp.eq.s32.totalorder %v1567, %v293
        %vm1569 = vcmp.eq.s32.totalorder %v1567, %v294
        %vm1570 = vcmp.eq.s32.totalorder %v1567, %v295
        %vm1571 = vcmp.eq.s32.totalorder %v1567, %v296
        %vm1572 = vcmp.eq.s32.totalorder %v1567, %v297
        %vm1573 = vcmp.eq.s32.totalorder %v1567, %v298
        %vm1574 = vcmp.eq.s32.totalorder %v1567, %v299
        %vm1575 = vcmp.eq.s32.totalorder %v1567, %v300
        %vm1576 = vcmp.eq.s32.totalorder %v1567, %v301
        %vm1577 = vcmp.eq.s32.totalorder %v1567, %v302
        %vm1578 = vcmp.eq.s32.totalorder %v1567, %v303
        %vm1579 = vcmp.eq.s32.totalorder %v1567, %v304
        %vm1580 = vcmp.eq.s32.totalorder %v1567, %v305
        %vm1581 = vcmp.eq.s32.totalorder %v1567, %v306
        %vm1582 = vcmp.eq.s32.totalorder %v1567, %v307
        %vm1583 = vcmp.eq.s32.totalorder %v1567, %v308
        %v1584 = vsel %vm1568, 1, 0
        %v1585 = vsel %vm1569, 1, 0
        %v1586 = vsel %vm1570, 1, 0
        %v1587 = vsel %vm1571, 1, 0
        %v1588 = vsel %vm1572, 1, 0
        %v1589 = vsel %vm1573, 1, 0
        %v1590 = vsel %vm1574, 1, 0
        %v1591 = vsel %vm1575, 1, 0
        %v1592 = vsel %vm1576, 1, 0
        %v1593 = vsel %vm1577, 1, 0
        %v1594 = vsel %vm1578, 1, 0
        %v1595 = vsel %vm1579, 1, 0
        %v1596 = vsel %vm1580, 1, 0
        %v1597 = vsel %vm1581, 1, 0
        %v1598 = vsel %vm1582, 1, 0
        %v1599 = vsel %vm1583, 1, 0
        %v1600 = vcvt.s32.f32 %v1584
        %v1601 = vcvt.s32.f32 %v1585
        %v1602 = vcvt.s32.f32 %v1586
        %v1603 = vcvt.s32.f32 %v1587
        %v1604 = vcvt.s32.f32 %v1588
        %v1605 = vcvt.s32.f32 %v1589
        %v1606 = vcvt.s32.f32 %v1590
        %v1607 = vcvt.s32.f32 %v1591
        %v1608 = vcvt.s32.f32 %v1592
        %v1609 = vcvt.s32.f32 %v1593
        %v1610 = vcvt.s32.f32 %v1594
        %v1611 = vcvt.s32.f32 %v1595
        %v1612 = vcvt.s32.f32 %v1596
        %v1613 = vcvt.s32.f32 %v1597
        %v1614 = vcvt.s32.f32 %v1598
        %v1615 = vcvt.s32.f32 %v1599
        %v1616 = vadd.f32 %v1551, %v1600
        %v1617 = vadd.f32 %v1552, %v1601
        %v1618 = vadd.f32 %v1553, %v1602
        %v1619 = vadd.f32 %v1554, %v1603
        %v1620 = vadd.f32 %v1555, %v1604
        %v1621 = vadd.f32 %v1556, %v1605
        %v1622 = vadd.f32 %v1557, %v1606
        %v1623 = vadd.f32 %v1558, %v1607
        %v1624 = vadd.f32 %v1559, %v1608
        %v1625 = vadd.f32 %v1560, %v1609
        %v1626 = vadd.f32 %v1561, %v1610
        %v1627 = vadd.f32 %v1562, %v1611
        %v1628 = vadd.f32 %v1563, %v1612
        %v1629 = vadd.f32 %v1564, %v1613
        %v1630 = vadd.f32 %v1565, %v1614
        %v1631 = vadd.f32 %v1566, %v1615
        %v1632 = vperm.slane %v1387, 4
        %vm1633 = vcmp.eq.s32.totalorder %v1632, %v293
        %vm1634 = vcmp.eq.s32.totalorder %v1632, %v294
        %vm1635 = vcmp.eq.s32.totalorder %v1632, %v295
        %vm1636 = vcmp.eq.s32.totalorder %v1632, %v296
        %vm1637 = vcmp.eq.s32.totalorder %v1632, %v297
        %vm1638 = vcmp.eq.s32.totalorder %v1632, %v298
        %vm1639 = vcmp.eq.s32.totalorder %v1632, %v299
        %vm1640 = vcmp.eq.s32.totalorder %v1632, %v300
        %vm1641 = vcmp.eq.s32.totalorder %v1632, %v301
        %vm1642 = vcmp.eq.s32.totalorder %v1632, %v302
        %vm1643 = vcmp.eq.s32.totalorder %v1632, %v303
        %vm1644 = vcmp.eq.s32.totalorder %v1632, %v304
        %vm1645 = vcmp.eq.s32.totalorder %v1632, %v305
        %vm1646 = vcmp.eq.s32.totalorder %v1632, %v306
        %vm1647 = vcmp.eq.s32.totalorder %v1632, %v307
        %vm1648 = vcmp.eq.s32.totalorder %v1632, %v308
        %v1649 = vsel %vm1633, 1, 0
        %v1650 = vsel %vm1634, 1, 0
        %v1651 = vsel %vm1635, 1, 0
        %v1652 = vsel %vm1636, 1, 0
        %v1653 = vsel %vm1637, 1, 0
        %v1654 = vsel %vm1638, 1, 0
        %v1655 = vsel %vm1639, 1, 0
        %v1656 = vsel %vm1640, 1, 0
        %v1657 = vsel %vm1641, 1, 0
        %v1658 = vsel %vm1642, 1, 0
        %v1659 = vsel %vm1643, 1, 0
        %v1660 = vsel %vm1644, 1, 0
        %v1661 = vsel %vm1645, 1, 0
        %v1662 = vsel %vm1646, 1, 0
        %v1663 = vsel %vm1647, 1, 0
        %v1664 = vsel %vm1648, 1, 0
        %v1665 = vcvt.s32.f32 %v1649
        %v1666 = vcvt.s32.f32 %v1650
        %v1667 = vcvt.s32.f32 %v1651
        %v1668 = vcvt.s32.f32 %v1652
        %v1669 = vcvt.s32.f32 %v1653
        %v1670 = vcvt.s32.f32 %v1654
        %v1671 = vcvt.s32.f32 %v1655
        %v1672 = vcvt.s32.f32 %v1656
        %v1673 = vcvt.s32.f32 %v1657
        %v1674 = vcvt.s32.f32 %v1658
        %v1675 = vcvt.s32.f32 %v1659
        %v1676 = vcvt.s32.f32 %v1660
        %v1677 = vcvt.s32.f32 %v1661
        %v1678 = vcvt.s32.f32 %v1662
        %v1679 = vcvt.s32.f32 %v1663
        %v1680 = vcvt.s32.f32 %v1664
        %v1681 = vadd.f32 %v1616, %v1665
        %v1682 = vadd.f32 %v1617, %v1666
        %v1683 = vadd.f32 %v1618, %v1667
        %v1684 = vadd.f32 %v1619, %v1668
        %v1685 = vadd.f32 %v1620, %v1669
        %v1686 = vadd.f32 %v1621, %v1670
        %v1687 = vadd.f32 %v1622, %v1671
        %v1688 = vadd.f32 %v1623, %v1672
        %v1689 = vadd.f32 %v1624, %v1673
        %v1690 = vadd.f32 %v1625, %v1674
        %v1691 = vadd.f32 %v1626, %v1675
        %v1692 = vadd.f32 %v1627, %v1676
        %v1693 = vadd.f32 %v1628, %v1677
        %v1694 = vadd.f32 %v1629, %v1678
        %v1695 = vadd.f32 %v1630, %v1679
        %v1696 = vadd.f32 %v1631, %v1680
        %v1697 = vperm.slane %v1387, 5
        %vm1698 = vcmp.eq.s32.totalorder %v1697, %v293
        %vm1699 = vcmp.eq.s32.totalorder %v1697, %v294
        %vm1700 = vcmp.eq.s32.totalorder %v1697, %v295
        %vm1701 = vcmp.eq.s32.totalorder %v1697, %v296
        %vm1702 = vcmp.eq.s32.totalorder %v1697, %v297
        %vm1703 = vcmp.eq.s32.totalorder %v1697, %v298
        %vm1704 = vcmp.eq.s32.totalorder %v1697, %v299
        %vm1705 = vcmp.eq.s32.totalorder %v1697, %v300
        %vm1706 = vcmp.eq.s32.totalorder %v1697, %v301
        %vm1707 = vcmp.eq.s32.totalorder %v1697, %v302
        %vm1708 = vcmp.eq.s32.totalorder %v1697, %v303
        %vm1709 = vcmp.eq.s32.totalorder %v1697, %v304
        %vm1710 = vcmp.eq.s32.totalorder %v1697, %v305
        %vm1711 = vcmp.eq.s32.totalorder %v1697, %v306
        %vm1712 = vcmp.eq.s32.totalorder %v1697, %v307
        %vm1713 = vcmp.eq.s32.totalorder %v1697, %v308
        %v1714 = vsel %vm1698, 1, 0
        %v1715 = vsel %vm1699, 1, 0
        %v1716 = vsel %vm1700, 1, 0
        %v1717 = vsel %vm1701, 1, 0
        %v1718 = vsel %vm1702, 1, 0
        %v1719 = vsel %vm1703, 1, 0
        %v1720 = vsel %vm1704, 1, 0
        %v1721 = vsel %vm1705, 1, 0
        %v1722 = vsel %vm1706, 1, 0
        %v1723 = vsel %vm1707, 1, 0
        %v1724 = vsel %vm1708, 1, 0
        %v1725 = vsel %vm1709, 1, 0
        %v1726 = vsel %vm1710, 1, 0
        %v1727 = vsel %vm1711, 1, 0
        %v1728 = vsel %vm1712, 1, 0
        %v1729 = vsel %vm1713, 1, 0
        %v1730 = vcvt.s32.f32 %v1714
        %v1731 = vcvt.s32.f32 %v1715
        %v1732 = vcvt.s32.f32 %v1716
        %v1733 = vcvt.s32.f32 %v1717
        %v1734 = vcvt.s32.f32 %v1718
        %v1735 = vcvt.s32.f32 %v1719
        %v1736 = vcvt.s32.f32 %v1720
        %v1737 = vcvt.s32.f32 %v1721
        %v1738 = vcvt.s32.f32 %v1722
        %v1739 = vcvt.s32.f32 %v1723
        %v1740 = vcvt.s32.f32 %v1724
        %v1741 = vcvt.s32.f32 %v1725
        %v1742 = vcvt.s32.f32 %v1726
        %v1743 = vcvt.s32.f32 %v1727
        %v1744 = vcvt.s32.f32 %v1728
        %v1745 = vcvt.s32.f32 %v1729
        %v1746 = vadd.f32 %v1681, %v1730
        %v1747 = vadd.f32 %v1682, %v1731
        %v1748 = vadd.f32 %v1683, %v1732
        %v1749 = vadd.f32 %v1684, %v1733
        %v1750 = vadd.f32 %v1685, %v1734
        %v1751 = vadd.f32 %v1686, %v1735
        %v1752 = vadd.f32 %v1687, %v1736
        %v1753 = vadd.f32 %v1688, %v1737
        %v1754 = vadd.f32 %v1689, %v1738
        %v1755 = vadd.f32 %v1690, %v1739
        %v1756 = vadd.f32 %v1691, %v1740
        %v1757 = vadd.f32 %v1692, %v1741
        %v1758 = vadd.f32 %v1693, %v1742
        %v1759 = vadd.f32 %v1694, %v1743
        %v1760 = vadd.f32 %v1695, %v1744
        %v1761 = vadd.f32 %v1696, %v1745
        %v1762 = vperm.slane %v1387, 6
        %vm1763 = vcmp.eq.s32.totalorder %v1762, %v293
        %vm1764 = vcmp.eq.s32.totalorder %v1762, %v294
        %vm1765 = vcmp.eq.s32.totalorder %v1762, %v295
        %vm1766 = vcmp.eq.s32.totalorder %v1762, %v296
        %vm1767 = vcmp.eq.s32.totalorder %v1762, %v297
        %vm1768 = vcmp.eq.s32.totalorder %v1762, %v298
        %vm1769 = vcmp.eq.s32.totalorder %v1762, %v299
        %vm1770 = vcmp.eq.s32.totalorder %v1762, %v300
        %vm1771 = vcmp.eq.s32.totalorder %v1762, %v301
        %vm1772 = vcmp.eq.s32.totalorder %v1762, %v302
        %vm1773 = vcmp.eq.s32.totalorder %v1762, %v303
        %vm1774 = vcmp.eq.s32.totalorder %v1762, %v304
        %vm1775 = vcmp.eq.s32.totalorder %v1762, %v305
        %vm1776 = vcmp.eq.s32.totalorder %v1762, %v306
        %vm1777 = vcmp.eq.s32.totalorder %v1762, %v307
        %vm1778 = vcmp.eq.s32.totalorder %v1762, %v308
        %v1779 = vsel %vm1763, 1, 0
        %v1780 = vsel %vm1764, 1, 0
        %v1781 = vsel %vm1765, 1, 0
        %v1782 = vsel %vm1766, 1, 0
        %v1783 = vsel %vm1767, 1, 0
        %v1784 = vsel %vm1768, 1, 0
        %v1785 = vsel %vm1769, 1, 0
        %v1786 = vsel %vm1770, 1, 0
        %v1787 = vsel %vm1771, 1, 0
        %v1788 = vsel %vm1772, 1, 0
        %v1789 = vsel %vm1773, 1, 0
        %v1790 = vsel %vm1774, 1, 0
        %v1791 = vsel %vm1775, 1, 0
        %v1792 = vsel %vm1776, 1, 0
        %v1793 = vsel %vm1777, 1, 0
        %v1794 = vsel %vm1778, 1, 0
        %v1795 = vcvt.s32.f32 %v1779
        %v1796 = vcvt.s32.f32 %v1780
        %v1797 = vcvt.s32.f32 %v1781
        %v1798 = vcvt.s32.f32 %v1782
        %v1799 = vcvt.s32.f32 %v1783
        %v1800 = vcvt.s32.f32 %v1784
        %v1801 = vcvt.s32.f32 %v1785
        %v1802 = vcvt.s32.f32 %v1786
        %v1803 = vcvt.s32.f32 %v1787
        %v1804 = vcvt.s32.f32 %v1788
        %v1805 = vcvt.s32.f32 %v1789
        %v1806 = vcvt.s32.f32 %v1790
        %v1807 = vcvt.s32.f32 %v1791
        %v1808 = vcvt.s32.f32 %v1792
        %v1809 = vcvt.s32.f32 %v1793
        %v1810 = vcvt.s32.f32 %v1794
        %v1811 = vadd.f32 %v1746, %v1795
        %v1812 = vadd.f32 %v1747, %v1796
        %v1813 = vadd.f32 %v1748, %v1797
        %v1814 = vadd.f32 %v1749, %v1798
        %v1815 = vadd.f32 %v1750, %v1799
        %v1816 = vadd.f32 %v1751, %v1800
        %v1817 = vadd.f32 %v1752, %v1801
        %v1818 = vadd.f32 %v1753, %v1802
        %v1819 = vadd.f32 %v1754, %v1803
        %v1820 = vadd.f32 %v1755, %v1804
        %v1821 = vadd.f32 %v1756, %v1805
        %v1822 = vadd.f32 %v1757, %v1806
        %v1823 = vadd.f32 %v1758, %v1807
        %v1824 = vadd.f32 %v1759, %v1808
        %v1825 = vadd.f32 %v1760, %v1809
        %v1826 = vadd.f32 %v1761, %v1810
        %v1827 = vperm.slane %v1387, 7
        %vm1828 = vcmp.eq.s32.totalorder %v1827, %v293
        %vm1829 = vcmp.eq.s32.totalorder %v1827, %v294
        %vm1830 = vcmp.eq.s32.totalorder %v1827, %v295
        %vm1831 = vcmp.eq.s32.totalorder %v1827, %v296
        %vm1832 = vcmp.eq.s32.totalorder %v1827, %v297
        %vm1833 = vcmp.eq.s32.totalorder %v1827, %v298
        %vm1834 = vcmp.eq.s32.totalorder %v1827, %v299
        %vm1835 = vcmp.eq.s32.totalorder %v1827, %v300
        %vm1836 = vcmp.eq.s32.totalorder %v1827, %v301
        %vm1837 = vcmp.eq.s32.totalorder %v1827, %v302
        %vm1838 = vcmp.eq.s32.totalorder %v1827, %v303
        %vm1839 = vcmp.eq.s32.totalorder %v1827, %v304
        %vm1840 = vcmp.eq.s32.totalorder %v1827, %v305
        %vm1841 = vcmp.eq.s32.totalorder %v1827, %v306
        %vm1842 = vcmp.eq.s32.totalorder %v1827, %v307
        %vm1843 = vcmp.eq.s32.totalorder %v1827, %v308
        %v1844 = vsel %vm1828, 1, 0
        %v1845 = vsel %vm1829, 1, 0
        %v1846 = vsel %vm1830, 1, 0
        %v1847 = vsel %vm1831, 1, 0
        %v1848 = vsel %vm1832, 1, 0
        %v1849 = vsel %vm1833, 1, 0
        %v1850 = vsel %vm1834, 1, 0
        %v1851 = vsel %vm1835, 1, 0
        %v1852 = vsel %vm1836, 1, 0
        %v1853 = vsel %vm1837, 1, 0
        %v1854 = vsel %vm1838, 1, 0
        %v1855 = vsel %vm1839, 1, 0
        %v1856 = vsel %vm1840, 1, 0
        %v1857 = vsel %vm1841, 1, 0
        %v1858 = vsel %vm1842, 1, 0
        %v1859 = vsel %vm1843, 1, 0
        %v1860 = vcvt.s32.f32 %v1844
        %v1861 = vcvt.s32.f32 %v1845
        %v1862 = vcvt.s32.f32 %v1846
        %v1863 = vcvt.s32.f32 %v1847
        %v1864 = vcvt.s32.f32 %v1848
        %v1865 = vcvt.s32.f32 %v1849
        %v1866 = vcvt.s32.f32 %v1850
        %v1867 = vcvt.s32.f32 %v1851
        %v1868 = vcvt.s32.f32 %v1852
        %v1869 = vcvt.s32.f32 %v1853
        %v1870 = vcvt.s32.f32 %v1854
        %v1871 = vcvt.s32.f32 %v1855
        %v1872 = vcvt.s32.f32 %v1856
        %v1873 = vcvt.s32.f32 %v1857
        %v1874 = vcvt.s32.f32 %v1858
        %v1875 = vcvt.s32.f32 %v1859
        %v1876 = vadd.f32 %v1811, %v1860
        %v1877 = vadd.f32 %v1812, %v1861
        %v1878 = vadd.f32 %v1813, %v1862
        %v1879 = vadd.f32 %v1814, %v1863
        %v1880 = vadd.f32 %v1815, %v1864
        %v1881 = vadd.f32 %v1816, %v1865
        %v1882 = vadd.f32 %v1817, %v1866
        %v1883 = vadd.f32 %v1818, %v1867
        %v1884 = vadd.f32 %v1819, %v1868
        %v1885 = vadd.f32 %v1820, %v1869
        %v1886 = vadd.f32 %v1821, %v1870
        %v1887 = vadd.f32 %v1822, %v1871
        %v1888 = vadd.f32 %v1823, %v1872
        %v1889 = vadd.f32 %v1824, %v1873
        %v1890 = vadd.f32 %v1825, %v1874
        %v1891 = vadd.f32 %v1826, %v1875
        %s1892 = scalar_lea.vmem %s247, 16 [#allocation4]
        %v1893 = vld [vmem:[%s1892] sm:$0xff]
        %v1894 = vld [vmem:[%s1892 + $0x18] sm:$0xff]
        %v1895 = vld [vmem:[#allocation2] sm:$0xff]
        %v1896 = vld [vmem:[#allocation2 + $0x8] sm:$0xff]
        %1897 = vmatpush.msra.mxu0 %v1891
        %1898 = vmatpush.msra.mxu0 %v1890
        %1899 = vmatpush.msra.mxu0 %v1889
        %1900 = vmatpush.msra.mxu0 %v1888
        %1901 = vmatpush.msra.mxu0 %v1887
        %1902 = vmatpush.msra.mxu0 %v1886
        %1903 = vmatpush.msra.mxu0 %v1885
        %1904 = vmatpush.msra.mxu0 %v1884
        %1905 = vmatpush.msra.mxu0 %v1883
        %1906 = vmatpush.msra.mxu0 %v1882
        %1907 = vmatpush.msra.mxu0 %v1881
        %1908 = vmatpush.msra.mxu0 %v1880
        %1909 = vmatpush.msra.mxu0 %v1879
        %1910 = vmatpush.msra.mxu0 %v1878
        %1911 = vmatpush.msra.mxu0 %v1877
        %1912 = vmatpush.msra.mxu0 %v1876
        %1913 = vmatmul.f32.gmra.mxu0 %v1893
        %v1914 = vpop.f32.mrf.mxu0
        %v1915 = vadd.f32 0.0, %v1914
        %1916 = vmatmul.f32.gmra.mxu0 %v1894
        %v1917 = vpop.f32.mrf.mxu0
        %v1918 = vadd.f32 0.0, %v1917
        %1919 = vdwg.mxu0
        %v1920 = vadd.f32 %v1895, %v1915
        %v1921 = vadd.f32 %v1896, %v1918
        %1922 = vst [vmem:[#allocation2] sm:$0xff] %v1920
        %1923 = vst [vmem:[#allocation2 + $0x8] sm:$0xff] %v1921
        %s1924 = smul.u32 %s28, 128
        %s1925 = sshra.s32 %s1924, 7
        %s1926 = sand.u32 %s1924, 127
        %s1927 = smul.addr %s1925, 8
        %s1928 = scalar_lea.vmem %s247, %s1927 [#allocation4]
        %v1929 = vld [vmem:[%s1928] sm:$0xff]
        %v1930 = vld [vmem:[%s1928 + $0x18] sm:$0xff]
        %s1931 = sld [smem:[#allocation3]]
        %s1932 = sadd.f32 %s1931, 1.0
        %v1933 = vstv %s1932
        %v1934 = vmul.f32 %v1933, %v1929
        %v1935 = vmul.f32 %v1933, %v1930
        %v1936 = vld [vmem:[#allocation2] sm:$0xff]
        %v1937 = vld [vmem:[#allocation2 + $0x8] sm:$0xff]
        %v1938 = vadd.f32 %v1934, %v1936
        %v1939 = vadd.f32 %v1935, %v1937
        %v1940 = vld [vmem:[%s3] sm:$0xff]
        %v1941 = vld [vmem:[%s3 + $0x8] sm:$0xff]
        %v1942 = vld [vmem:[%s3 + $0x10] sm:$0xff]
        %v1943 = vld [vmem:[%s3 + $0x18] sm:$0xff]
        %v1944 = vld [vmem:[%s4] sm:$0xff]
        %v1945 = vld [vmem:[%s4 + $0x8] sm:$0xff]
        %v1946 = vld [vmem:[%s4 + $0x10] sm:$0xff]
        %v1947 = vld [vmem:[%s4 + $0x18] sm:$0xff]
        %1949 = vset.pattern.permute.xlu0 0
        %1950 = vperm.xlu0 %1949, %v1944
        %v1951 = vpop.permute.xlu0 %1950
        %1954 = vset.pattern.permute.xlu0 0
        %1955 = vperm.xlu0 %1954, %v1945
        %v1956 = vpop.permute.xlu0 %1955
        %1959 = vset.pattern.permute.xlu0 0
        %1960 = vperm.xlu0 %1959, %v1946
        %v1961 = vpop.permute.xlu0 %1960
        %1964 = vset.pattern.permute.xlu0 0
        %1965 = vperm.xlu0 %1964, %v1947
        %v1966 = vpop.permute.xlu0 %1965
        %vm1968 = vcmask 130048
        %v1970 = vsel %vm1968, %v1940, 0
        %v1973 = vsel %vm1968, %v1941, 0
        %v1976 = vsel %vm1968, %v1942, 0
        %v1979 = vsel %vm1968, %v1943, 0
        %1981 = vmatpush.msra.mxu0 0.0
        %1982 = vmatpush.msra.mxu0 0.0
        %1983 = vmatpush.msra.mxu0 0.0
        %1984 = vmatpush.msra.mxu0 0.0
        %1985 = vmatpush.msra.mxu0 0.0
        %1986 = vmatpush.msra.mxu0 0.0
        %1987 = vmatpush.msra.mxu0 0.0
        %1988 = vmatpush.msra.mxu0 0.0
        %1989 = vmatpush.msra.mxu0 0.0
        %1990 = vmatpush.msra.mxu0 0.0
        %1991 = vmatpush.msra.mxu0 0.0
        %1992 = vmatpush.msra.mxu0 0.0
        %1993 = vmatpush.msra.mxu0 0.0
        %1994 = vmatpush.msra.mxu0 0.0
        %1995 = vmatpush.msra.mxu0 %v1939
        %1996 = vmatpush.msra.mxu0 %v1938
        %1997 = vmatmul.f32.gmra.mxu0 %v1970
        %v1998 = vpop.f32.mrf.mxu0
        %v1999 = vadd.f32 %v1951, %v1998
        %2000 = vmatmul.f32.gmra.mxu0 %v1973
        %v2001 = vpop.f32.mrf.mxu0
        %v2002 = vadd.f32 %v1956, %v2001
        %2003 = vmatmul.f32.gmra.mxu0 %v1976
        %v2004 = vpop.f32.mrf.mxu0
        %v2005 = vadd.f32 %v1961, %v2004
        %2006 = vmatmul.f32.gmra.mxu0 %v1979
        %v2007 = vpop.f32.mrf.mxu0
        %v2008 = vadd.f32 %v1966, %v2007
        %2009 = vdwg.mxu0
        %v2010 = vmax.f32 %v1999, 0.0
        %v2011 = vmax.f32 %v2002, 0.0
        %v2012 = vmax.f32 %v2005, 0.0
        %v2013 = vmax.f32 %v2008, 0.0
        %2014 = vst [vmem:[%s282] sm:$0xff] %v2010
        %2015 = vst [vmem:[%s282 + $0x8] sm:$0xff] %v2011
        %2016 = vst [vmem:[%s282 + $0x10] sm:$0xff] %v2012
        %2017 = vst [vmem:[%s282 + $0x18] sm:$0xff] %v2013
        %s2018 = sand.u32 %s162, 1
        %s2019 = scalar_lea.sflag [#allocation6], %s2018
        %s2020 = sand.u32 %s162, 1
        %s2021 = smul.addr %s2020, 32
        %s2022 = scalar_lea.vmem [#allocation7], %s2021
        // Predicated region
        $region45: #{tpu_custom_call.1} parent=39 // pred_check
          %p2023 = pneg %p172
        $region46: #{tpu_custom_call.1} parent=39 // pred_check_branch
          %2025 = sbr.rel (%p2023) target = $region48
        $region47: #{tpu_custom_call.1} parent=39 // pred_region
          %2027 = vsyncadd %s2019, 0
          %s2028 = smul.addr %s27, 12
          %s2029 = sadd.s32 %s28, %s2028
          %s2030 = smul.addr %s2029, 8
          %s2031 = scalar_lea.hbm %s5, %s2030
          %s2032 = sshll.u32 %s2022, 4
          %s2033 = int_to_ptr.vmem [resolvable:$true] %s2032
          %s2034 = sshll.u32 %s2031, 4
          %s2035 = int_to_ptr.hbm [resolvable:$true] %s2034
          %2040 = dma.vmem_to_hbm [thread:$0]  %s2033, 512, %s2035, %s2019, 128, 384, 8
        $region48: #{tpu_custom_call.1} parent=39 // pred_fallthru
          _
      $region40: #{tpu_custom_call.1} parent=5 // pred_fallthru
        _
      %p2041 = scmp.le.s32.totalorder 2, %s18
      // Predicated region
      $region49: #{tpu_custom_call.1} parent=5 // pred_check
        %p2042 = pneg %p2041
      $region50: #{tpu_custom_call.1} parent=5 // pred_check_branch
        %2044 = sbr.rel (%p2042) target = $region52
      $region51: #{tpu_custom_call.1} parent=5 // pred_region
        %s2045 = ssub.s32 %s18, 2
        // Predicated region
        $region53: #{tpu_custom_call.1} parent=51 // pred_check
          %p2046 = pneg %p178
        $region54: #{tpu_custom_call.1} parent=51 // pred_check_branch
          %2048 = sbr.rel (%p2046) target = $region56
        $region55: #{tpu_custom_call.1} parent=51 // pred_region
          %s2049 = sand.u32 %s163, 1
          %s2050 = scalar_lea.sflag [#allocation6], %s2049
          %s2051 = sand.u32 %s163, 1
          %s2052 = smul.addr %s2051, 32
          %s2053 = scalar_lea.vmem [#allocation7], %s2052
          %2055 = dma.done %s2050, 512
        $region56: #{tpu_custom_call.1} parent=51 // pred_fallthru
          _
      $region52: #{tpu_custom_call.1} parent=5 // pred_fallthru
        _
    $region6: #{tpu_custom_call.1} parent=1 // loop_footer
      %s22 = sadd.s32 1, %s18
    $region7: #{tpu_custom_call.1} parent=1 // loop_footer_branch
      %17 = sbr.rel target = $region3
    $region8: #{tpu_custom_call.1} parent=1 // loop_exit
      _
    %2056 = vsyncpa [#allocation5], 1
    %s2057 = scalar_lea.sflag [#allocation5], 1
    %2058 = vsyncpa %s2057, 1
    %2059 = vsyncpa [#allocation6], 1
    %s2060 = scalar_lea.sflag [#allocation6], 1
    %2061 = vsyncpa %s2060, 1

</llo_original>
